<compile_context>
chip_gen: v6e
topology: v6e:2x2x1
jax: 0.10.0
libtpu: 0.0.40
codegen_flags: <defaults>
</compile_context>

<pallas_src>
import jax
import jax.numpy as jnp
from jax.experimental import pallas as pl
from jax.experimental.pallas import tpu as pltpu


def _gclstm_kernel(x_ref, s_ref, w_ref, thcat_ref, bias_ref, wc_ref, h_out_ref):
    """x_ref:[T,N,F_in]  s_ref:[N,N]  w_ref:[F_in,4H]  thcat_ref:[H,8H]
    bias_ref:[1,4H]  wc_ref:[1,3H]  h_out_ref:[N,H].
    Gate order along lanes everywhere: i, f, c, o (peepholes: i, f, o)."""
    T, N, f_in = x_ref.shape
    hid = thcat_ref.shape[0]

    s = s_ref[...]
    w = w_ref[...]
    thcat = thcat_ref[...]
    bias = bias_ref[...]
    wc = wc_ref[...]

    # Time-invariant peephole weight slices, hoisted out of the recurrence.
    wci = wc[:, 0 * hid:1 * hid]
    wcf = wc[:, 1 * hid:2 * hid]
    wco = wc[:, 2 * hid:3 * hid]

    # Hoist the time-invariant input projection for ALL steps off the serial
    # chain.  F_in == 1 -> rank-1 broadcast multiply on the VPU (no MXU).
    x_all = x_ref[...]                                       # [T, N, F_in]
    if f_in == 1:
        xw_all = x_all * w + bias                            # [T, N, 4H]
    else:
        xw_all = (jnp.einsum("tnf,fg->tng", x_all, w,
                             preferred_element_type=jnp.float32) + bias)

    h = jnp.zeros((N, hid), jnp.float32)
    c = jnp.zeros((N, hid), jnp.float32)

    # T is small and static -> fully unrolled; H/C stay in vregs between steps.
    for t in range(T):
        # One lane-dense [N,32]@[32,256] matmul covers both Cheb terms,
        # then (S@H)@Th1 is reassociated to S@(H@Th1): [N,N]@[N,128].
        p = jnp.dot(h, thcat, preferred_element_type=jnp.float32)   # [N, 8H]
        g = (xw_all[t]
             + p[:, :4 * hid]
             + jnp.dot(s, p[:, 4 * hid:], preferred_element_type=jnp.float32))

        i_g = jax.nn.sigmoid(g[:, 0 * hid:1 * hid] + wci * c)
        f_g = jax.nn.sigmoid(g[:, 1 * hid:2 * hid] + wcf * c)
        c_t = jnp.tanh(g[:, 2 * hid:3 * hid])
        c = f_g * c + i_g * c_t
        o_g = jax.nn.sigmoid(g[:, 3 * hid:4 * hid] + wco * c)   # updated C
        h = o_g * jnp.tanh(c)

    h_out_ref[...] = h.astype(h_out_ref.dtype)


def gclstm_forward(x_seq, s_dense, w_cat, thcat, bias_cat, wc_cat):
    """Run GC-LSTM over the whole lookback window; return final H ([N, hid])."""
    T, N, f_in = x_seq.shape
    hid = thcat.shape[0]

    # Advisory cost hint for XLA's scheduler (kernel is tiny / latency-bound).
    flops = T * (2 * N * hid * (8 * hid) + 2 * N * N * (4 * hid) + 12 * N * hid) \
        + 2 * T * N * (4 * hid)
    transcendentals = T * 5 * N * hid
    bytes_accessed = sum(int(a.size) * 4 for a in
                         (x_seq, s_dense, w_cat, thcat, bias_cat, wc_cat)) \
        + N * hid * 4

    vmem = pl.BlockSpec(memory_space=pltpu.MemorySpace.VMEM)   # whole-resident
    return pl.pallas_call(
        _gclstm_kernel,
        out_shape=jax.ShapeDtypeStruct((N, hid), jnp.float32),
        in_specs=[vmem] * 6,
        out_specs=pl.BlockSpec(memory_space=pltpu.MemorySpace.VMEM),
        cost_estimate=pl.CostEstimate(flops=flops,
                                      transcendentals=transcendentals,
                                      bytes_accessed=bytes_accessed),
    )(x_seq, s_dense, w_cat, thcat, bias_cat, wc_cat)
    # TODO(synk): if a batch of sequences exists, add a leading "parallel"
    # grid axis over batch blocks (fills the MXU, engages v7x's 2nd TC); for
    # large N, tile S over node row-blocks (S must fit VMEM: ~64 MiB on v7x);
    # cast S/H/ThCat to bf16 for the MXU on v6e/v7x once N or batch grows.


def build_scaled_laplacian(edge_index, num_nodes):
    """Dense S = -D^{-1/2} A D^{-1/2}  (= 2*L_sym/lambda_max - I with
    lambda_max = 2, which is what ChebConv uses when lambda_max is None)."""
    src, dst = edge_index
    a = jnp.zeros((num_nodes, num_nodes), jnp.float32)
    a = a.at[src, dst].add(1.0)
    deg = a.sum(axis=1)
    d_inv_sqrt = jnp.where(deg > 0, 1.0 / jnp.sqrt(jnp.maximum(deg, 1e-12)), 0.0)
    return -(d_inv_sqrt[:, None] * a * d_inv_sqrt[None, :])


def glorot(key, shape):
    fan_in, fan_out = shape[-2], shape[-1]
    lim = jnp.sqrt(6.0 / (fan_in + fan_out))
    return jax.random.uniform(key, shape, jnp.float32, -lim, lim)


def init_params(key, f_in, hid):
    """Fused-gate parameters (gate order i, f, c, o along the last axis).

    GCLSTM._set_parameters: glorot for W_*, glorot for peephole w_c_*, zeros
    for gate biases; ChebConv lins glorot, ChebConv bias zeros.  The two Cheb
    weights are concatenated along lanes into ThCat = [Th0_cat | Th1_cat]."""
    ks = jax.random.split(key, 15)
    w_cat = jnp.concatenate([glorot(ks[g], (f_in, hid)) for g in range(4)], -1)
    th0_cat = jnp.concatenate([glorot(ks[4 + g], (hid, hid)).T for g in range(4)], -1)
    th1_cat = jnp.concatenate([glorot(ks[8 + g], (hid, hid)).T for g in range(4)], -1)
    thcat = jnp.concatenate([th0_cat, th1_cat], -1)            # [hid, 8*hid]
    wc_cat = jnp.concatenate([glorot(ks[12 + g], (1, hid)) for g in range(3)], -1)
    bias_cat = jnp.zeros((1, 4 * hid), jnp.float32)
    return w_cat, th0_cat, th1_cat, thcat, bias_cat, wc_cat


def gclstm_reference(x_seq, s, w_cat, th0_cat, th1_cat, bias_cat, wc_cat):
    """Pure-JAX reference of the same forward pass, with the original
    (S@H)@Theta1 association and per-gate matmuls (for validation)."""
    T, N, _ = x_seq.shape
    hid = th0_cat.shape[0]
    h = jnp.zeros((N, hid), jnp.float32)
    c = jnp.zeros((N, hid), jnp.float32)
    for t in range(T):
        x = x_seq[t]
        sh = s @ h

        def pre(g):
            sl = slice(g * hid, (g + 1) * hid)
            return (x @ w_cat[:, sl] + h @ th0_cat[:, sl]
                    + sh @ th1_cat[:, sl] + bias_cat[:, sl])

        i_g = jax.nn.sigmoid(pre(0) + wc_cat[:, 0 * hid:1 * hid] * c)
        f_g = jax.nn.sigmoid(pre(1) + wc_cat[:, 1 * hid:2 * hid] * c)
        c_t = jnp.tanh(pre(2))
        c = f_g * c + i_g * c_t
        o_g = jax.nn.sigmoid(pre(3) + wc_cat[:, 2 * hid:3 * hid] * c)
        h = o_g * jnp.tanh(c)
    return h


if __name__ == "__main__":
    # args: lookback=8, lstm_hidden_size=32; GCLSTM built with in_channels=1.
    T = 8          # lookback (number of snapshots in InputList)
    N = 16         # number of graph nodes
    F_IN = 1       # in_channels
    HID = 32       # lstm_hidden_size

    key = jax.random.PRNGKey(0)
    k_x, k_p = jax.random.split(key)

    # Node features for each snapshot: X.x has shape [N, 1].
    x_seq = jax.random.normal(k_x, (T, N, F_IN), jnp.float32)

    # Synthetic symmetric ring graph (same edge_index at every step).
    src = jnp.arange(N, dtype=jnp.int32)
    dst = (src + 1) % N
    edge_index = jnp.stack([jnp.concatenate([src, dst]),
                            jnp.concatenate([dst, src])])
    s_dense = build_scaled_laplacian(edge_index, N)

    w_cat, th0_cat, th1_cat, thcat, bias_cat, wc_cat = init_params(k_p, F_IN, HID)

    h_final = gclstm_forward(x_seq, s_dense, w_cat, thcat, bias_cat, wc_cat)
    h_final = jax.block_until_ready(h_final)

    h_ref = gclstm_reference(x_seq, s_dense, w_cat, th0_cat, th1_cat,
                             bias_cat, wc_cat)
    assert h_final.shape == (N, HID)
    assert jnp.all(jnp.isfinite(h_final))
    assert jnp.allclose(h_final, h_ref, atol=1e-4, rtol=1e-4)

    print("KERNEL_OK")
</pallas_src>

<mosaic_0001>
module attributes {stable_mosaic.version = 11 : i64} {
  func.func @_gclstm_kernel(%arg0: memref<8x16x1xf32, #tpu.memory_space<vmem>>, %arg1: memref<16x16xf32, #tpu.memory_space<vmem>>, %arg2: memref<1x128xf32, #tpu.memory_space<vmem>>, %arg3: memref<32x256xf32, #tpu.memory_space<vmem>>, %arg4: memref<1x128xf32, #tpu.memory_space<vmem>>, %arg5: memref<1x96xf32, #tpu.memory_space<vmem>>, %arg6: memref<16x32xf32, #tpu.memory_space<vmem>>) attributes {dimension_semantics = [], scalar_prefetch = 0 : i64, scratch_operands = 0 : i64, tpu.core_type = #tpu.core_type<tc>} {
    %c0 = arith.constant 0 : index
    %c0_0 = arith.constant 0 : index
    %0 = vector.load %arg1[%c0, %c0_0] : memref<16x16xf32, #tpu.memory_space<vmem>>, vector<16x16xf32>
    %c0_1 = arith.constant 0 : index
    %c0_2 = arith.constant 0 : index
    %1 = vector.load %arg2[%c0_1, %c0_2] : memref<1x128xf32, #tpu.memory_space<vmem>>, vector<1x128xf32>
    %c0_3 = arith.constant 0 : index
    %c0_4 = arith.constant 0 : index
    %2 = vector.load %arg3[%c0_3, %c0_4] : memref<32x256xf32, #tpu.memory_space<vmem>>, vector<32x256xf32>
    %c0_5 = arith.constant 0 : index
    %c0_6 = arith.constant 0 : index
    %3 = vector.load %arg4[%c0_5, %c0_6] : memref<1x128xf32, #tpu.memory_space<vmem>>, vector<1x128xf32>
    %c0_7 = arith.constant 0 : index
    %c0_8 = arith.constant 0 : index
    %4 = vector.load %arg5[%c0_7, %c0_8] : memref<1x96xf32, #tpu.memory_space<vmem>>, vector<1x96xf32>
    %5 = vector.extract_strided_slice %4 {offsets = [0, 0], sizes = [1, 32], strides = [1, 1]} : vector<1x96xf32> to vector<1x32xf32>
    %6 = vector.extract_strided_slice %4 {offsets = [0, 32], sizes = [1, 32], strides = [1, 1]} : vector<1x96xf32> to vector<1x32xf32>
    %7 = vector.extract_strided_slice %4 {offsets = [0, 64], sizes = [1, 32], strides = [1, 1]} : vector<1x96xf32> to vector<1x32xf32>
    %c0_9 = arith.constant 0 : index
    %c0_10 = arith.constant 0 : index
    %c0_11 = arith.constant 0 : index
    %8 = vector.load %arg0[%c0_9, %c0_10, %c0_11] : memref<8x16x1xf32, #tpu.memory_space<vmem>>, vector<8x16x1xf32>
    %9 = vector.shape_cast %1 : vector<1x128xf32> to vector<1x1x128xf32>
    %10 = vector.broadcast %8 : vector<8x16x1xf32> to vector<8x16x128xf32>
    %11 = vector.broadcast %9 : vector<1x1x128xf32> to vector<8x16x128xf32>
    %12 = arith.mulf %10, %11 : vector<8x16x128xf32>
    %13 = vector.shape_cast %3 : vector<1x128xf32> to vector<1x1x128xf32>
    %14 = vector.broadcast %13 : vector<1x1x128xf32> to vector<8x16x128xf32>
    %15 = arith.addf %12, %14 : vector<8x16x128xf32>
    %cst = arith.constant 0.000000e+00 : f32
    %16 = vector.broadcast %cst : f32 to vector<16x32xf32>
    %cst_12 = arith.constant 0.000000e+00 : f32
    %17 = vector.broadcast %cst_12 : f32 to vector<16x32xf32>
    %cst_13 = arith.constant dense<0.000000e+00> : vector<16x256xf32>
    %18 = tpu.matmul %16, %2, %cst_13 {dimension_numbers = #tpu.dot_dimension_numbers<[1], [0], [0], [1], [0, 0, 1, 1], [], []>} : vector<16x32xf32>, vector<32x256xf32>, vector<16x256xf32> -> vector<16x256xf32>
    %19 = vector.extract_strided_slice %15 {offsets = [0, 0, 0], sizes = [1, 16, 128], strides = [1, 1, 1]} : vector<8x16x128xf32> to vector<1x16x128xf32>
    %20 = vector.shape_cast %19 : vector<1x16x128xf32> to vector<16x128xf32>
    %21 = vector.extract_strided_slice %18 {offsets = [0, 0], sizes = [16, 128], strides = [1, 1]} : vector<16x256xf32> to vector<16x128xf32>
    %22 = arith.addf %20, %21 : vector<16x128xf32>
    %23 = vector.extract_strided_slice %18 {offsets = [0, 128], sizes = [16, 128], strides = [1, 1]} : vector<16x256xf32> to vector<16x128xf32>
    %cst_14 = arith.constant dense<0.000000e+00> : vector<16x128xf32>
    %24 = tpu.matmul %0, %23, %cst_14 {dimension_numbers = #tpu.dot_dimension_numbers<[1], [0], [0], [1], [0, 0, 1, 1], [], []>} : vector<16x16xf32>, vector<16x128xf32>, vector<16x128xf32> -> vector<16x128xf32>
    %25 = arith.addf %22, %24 : vector<16x128xf32>
    %26 = vector.extract_strided_slice %25 {offsets = [0, 0], sizes = [16, 32], strides = [1, 1]} : vector<16x128xf32> to vector<16x32xf32>
    %27 = vector.broadcast %5 : vector<1x32xf32> to vector<16x32xf32>
    %28 = arith.mulf %27, %17 : vector<16x32xf32>
    %29 = arith.addf %26, %28 : vector<16x32xf32>
    %30 = arith.negf %29 : vector<16x32xf32>
    %31 = math.exp %30 : vector<16x32xf32>
    %cst_15 = arith.constant 1.000000e+00 : f32
    %32 = vector.broadcast %cst_15 : f32 to vector<16x32xf32>
    %33 = arith.addf %32, %31 : vector<16x32xf32>
    %34 = arith.divf %32, %33 : vector<16x32xf32>
    %35 = vector.extract_strided_slice %25 {offsets = [0, 32], sizes = [16, 32], strides = [1, 1]} : vector<16x128xf32> to vector<16x32xf32>
    %36 = vector.broadcast %6 : vector<1x32xf32> to vector<16x32xf32>
    %37 = arith.mulf %36, %17 : vector<16x32xf32>
    %38 = arith.addf %35, %37 : vector<16x32xf32>
    %39 = arith.negf %38 : vector<16x32xf32>
    %40 = math.exp %39 : vector<16x32xf32>
    %cst_16 = arith.constant 1.000000e+00 : f32
    %41 = vector.broadcast %cst_16 : f32 to vector<16x32xf32>
    %42 = arith.addf %41, %40 : vector<16x32xf32>
    %43 = arith.divf %41, %42 : vector<16x32xf32>
    %44 = vector.extract_strided_slice %25 {offsets = [0, 64], sizes = [16, 32], strides = [1, 1]} : vector<16x128xf32> to vector<16x32xf32>
    %45 = math.tanh %44 : vector<16x32xf32>
    %46 = arith.mulf %43, %17 : vector<16x32xf32>
    %47 = arith.mulf %34, %45 : vector<16x32xf32>
    %48 = arith.addf %46, %47 : vector<16x32xf32>
    %49 = vector.extract_strided_slice %25 {offsets = [0, 96], sizes = [16, 32], strides = [1, 1]} : vector<16x128xf32> to vector<16x32xf32>
    %50 = vector.broadcast %7 : vector<1x32xf32> to vector<16x32xf32>
    %51 = arith.mulf %50, %48 : vector<16x32xf32>
    %52 = arith.addf %49, %51 : vector<16x32xf32>
    %53 = arith.negf %52 : vector<16x32xf32>
    %54 = math.exp %53 : vector<16x32xf32>
    %cst_17 = arith.constant 1.000000e+00 : f32
    %55 = vector.broadcast %cst_17 : f32 to vector<16x32xf32>
    %56 = arith.addf %55, %54 : vector<16x32xf32>
    %57 = arith.divf %55, %56 : vector<16x32xf32>
    %58 = math.tanh %48 : vector<16x32xf32>
    %59 = arith.mulf %57, %58 : vector<16x32xf32>
    %cst_18 = arith.constant dense<0.000000e+00> : vector<16x256xf32>
    %60 = tpu.matmul %59, %2, %cst_18 {dimension_numbers = #tpu.dot_dimension_numbers<[1], [0], [0], [1], [0, 0, 1, 1], [], []>} : vector<16x32xf32>, vector<32x256xf32>, vector<16x256xf32> -> vector<16x256xf32>
    %61 = vector.extract_strided_slice %15 {offsets = [1, 0, 0], sizes = [1, 16, 128], strides = [1, 1, 1]} : vector<8x16x128xf32> to vector<1x16x128xf32>
    %62 = vector.shape_cast %61 : vector<1x16x128xf32> to vector<16x128xf32>
    %63 = vector.extract_strided_slice %60 {offsets = [0, 0], sizes = [16, 128], strides = [1, 1]} : vector<16x256xf32> to vector<16x128xf32>
    %64 = arith.addf %62, %63 : vector<16x128xf32>
    %65 = vector.extract_strided_slice %60 {offsets = [0, 128], sizes = [16, 128], strides = [1, 1]} : vector<16x256xf32> to vector<16x128xf32>
    %cst_19 = arith.constant dense<0.000000e+00> : vector<16x128xf32>
    %66 = tpu.matmul %0, %65, %cst_19 {dimension_numbers = #tpu.dot_dimension_numbers<[1], [0], [0], [1], [0, 0, 1, 1], [], []>} : vector<16x16xf32>, vector<16x128xf32>, vector<16x128xf32> -> vector<16x128xf32>
    %67 = arith.addf %64, %66 : vector<16x128xf32>
    %68 = vector.extract_strided_slice %67 {offsets = [0, 0], sizes = [16, 32], strides = [1, 1]} : vector<16x128xf32> to vector<16x32xf32>
    %69 = vector.broadcast %5 : vector<1x32xf32> to vector<16x32xf32>
    %70 = arith.mulf %69, %48 : vector<16x32xf32>
    %71 = arith.addf %68, %70 : vector<16x32xf32>
    %72 = arith.negf %71 : vector<16x32xf32>
    %73 = math.exp %72 : vector<16x32xf32>
    %cst_20 = arith.constant 1.000000e+00 : f32
    %74 = vector.broadcast %cst_20 : f32 to vector<16x32xf32>
    %75 = arith.addf %74, %73 : vector<16x32xf32>
    %76 = arith.divf %74, %75 : vector<16x32xf32>
    %77 = vector.extract_strided_slice %67 {offsets = [0, 32], sizes = [16, 32], strides = [1, 1]} : vector<16x128xf32> to vector<16x32xf32>
    %78 = vector.broadcast %6 : vector<1x32xf32> to vector<16x32xf32>
    %79 = arith.mulf %78, %48 : vector<16x32xf32>
    %80 = arith.addf %77, %79 : vector<16x32xf32>
    %81 = arith.negf %80 : vector<16x32xf32>
    %82 = math.exp %81 : vector<16x32xf32>
    %cst_21 = arith.constant 1.000000e+00 : f32
    %83 = vector.broadcast %cst_21 : f32 to vector<16x32xf32>
    %84 = arith.addf %83, %82 : vector<16x32xf32>
    %85 = arith.divf %83, %84 : vector<16x32xf32>
    %86 = vector.extract_strided_slice %67 {offsets = [0, 64], sizes = [16, 32], strides = [1, 1]} : vector<16x128xf32> to vector<16x32xf32>
    %87 = math.tanh %86 : vector<16x32xf32>
    %88 = arith.mulf %85, %48 : vector<16x32xf32>
    %89 = arith.mulf %76, %87 : vector<16x32xf32>
    %90 = arith.addf %88, %89 : vector<16x32xf32>
    %91 = vector.extract_strided_slice %67 {offsets = [0, 96], sizes = [16, 32], strides = [1, 1]} : vector<16x128xf32> to vector<16x32xf32>
    %92 = vector.broadcast %7 : vector<1x32xf32> to vector<16x32xf32>
    %93 = arith.mulf %92, %90 : vector<16x32xf32>
    %94 = arith.addf %91, %93 : vector<16x32xf32>
    %95 = arith.negf %94 : vector<16x32xf32>
    %96 = math.exp %95 : vector<16x32xf32>
    %cst_22 = arith.constant 1.000000e+00 : f32
    %97 = vector.broadcast %cst_22 : f32 to vector<16x32xf32>
    %98 = arith.addf %97, %96 : vector<16x32xf32>
    %99 = arith.divf %97, %98 : vector<16x32xf32>
    %100 = math.tanh %90 : vector<16x32xf32>
    %101 = arith.mulf %99, %100 : vector<16x32xf32>
    %cst_23 = arith.constant dense<0.000000e+00> : vector<16x256xf32>
    %102 = tpu.matmul %101, %2, %cst_23 {dimension_numbers = #tpu.dot_dimension_numbers<[1], [0], [0], [1], [0, 0, 1, 1], [], []>} : vector<16x32xf32>, vector<32x256xf32>, vector<16x256xf32> -> vector<16x256xf32>
    %103 = vector.extract_strided_slice %15 {offsets = [2, 0, 0], sizes = [1, 16, 128], strides = [1, 1, 1]} : vector<8x16x128xf32> to vector<1x16x128xf32>
    %104 = vector.shape_cast %103 : vector<1x16x128xf32> to vector<16x128xf32>
    %105 = vector.extract_strided_slice %102 {offsets = [0, 0], sizes = [16, 128], strides = [1, 1]} : vector<16x256xf32> to vector<16x128xf32>
    %106 = arith.addf %104, %105 : vector<16x128xf32>
    %107 = vector.extract_strided_slice %102 {offsets = [0, 128], sizes = [16, 128], strides = [1, 1]} : vector<16x256xf32> to vector<16x128xf32>
    %cst_24 = arith.constant dense<0.000000e+00> : vector<16x128xf32>
    %108 = tpu.matmul %0, %107, %cst_24 {dimension_numbers = #tpu.dot_dimension_numbers<[1], [0], [0], [1], [0, 0, 1, 1], [], []>} : vector<16x16xf32>, vector<16x128xf32>, vector<16x128xf32> -> vector<16x128xf32>
    %109 = arith.addf %106, %108 : vector<16x128xf32>
    %110 = vector.extract_strided_slice %109 {offsets = [0, 0], sizes = [16, 32], strides = [1, 1]} : vector<16x128xf32> to vector<16x32xf32>
    %111 = vector.broadcast %5 : vector<1x32xf32> to vector<16x32xf32>
    %112 = arith.mulf %111, %90 : vector<16x32xf32>
    %113 = arith.addf %110, %112 : vector<16x32xf32>
    %114 = arith.negf %113 : vector<16x32xf32>
    %115 = math.exp %114 : vector<16x32xf32>
    %cst_25 = arith.constant 1.000000e+00 : f32
    %116 = vector.broadcast %cst_25 : f32 to vector<16x32xf32>
    %117 = arith.addf %116, %115 : vector<16x32xf32>
    %118 = arith.divf %116, %117 : vector<16x32xf32>
    %119 = vector.extract_strided_slice %109 {offsets = [0, 32], sizes = [16, 32], strides = [1, 1]} : vector<16x128xf32> to vector<16x32xf32>
    %120 = vector.broadcast %6 : vector<1x32xf32> to vector<16x32xf32>
    %121 = arith.mulf %120, %90 : vector<16x32xf32>
    %122 = arith.addf %119, %121 : vector<16x32xf32>
    %123 = arith.negf %122 : vector<16x32xf32>
    %124 = math.exp %123 : vector<16x32xf32>
    %cst_26 = arith.constant 1.000000e+00 : f32
    %125 = vector.broadcast %cst_26 : f32 to vector<16x32xf32>
    %126 = arith.addf %125, %124 : vector<16x32xf32>
    %127 = arith.divf %125, %126 : vector<16x32xf32>
    %128 = vector.extract_strided_slice %109 {offsets = [0, 64], sizes = [16, 32], strides = [1, 1]} : vector<16x128xf32> to vector<16x32xf32>
    %129 = math.tanh %128 : vector<16x32xf32>
    %130 = arith.mulf %127, %90 : vector<16x32xf32>
    %131 = arith.mulf %118, %129 : vector<16x32xf32>
    %132 = arith.addf %130, %131 : vector<16x32xf32>
    %133 = vector.extract_strided_slice %109 {offsets = [0, 96], sizes = [16, 32], strides = [1, 1]} : vector<16x128xf32> to vector<16x32xf32>
    %134 = vector.broadcast %7 : vector<1x32xf32> to vector<16x32xf32>
    %135 = arith.mulf %134, %132 : vector<16x32xf32>
    %136 = arith.addf %133, %135 : vector<16x32xf32>
    %137 = arith.negf %136 : vector<16x32xf32>
    %138 = math.exp %137 : vector<16x32xf32>
    %cst_27 = arith.constant 1.000000e+00 : f32
    %139 = vector.broadcast %cst_27 : f32 to vector<16x32xf32>
    %140 = arith.addf %139, %138 : vector<16x32xf32>
    %141 = arith.divf %139, %140 : vector<16x32xf32>
    %142 = math.tanh %132 : vector<16x32xf32>
    %143 = arith.mulf %141, %142 : vector<16x32xf32>
    %cst_28 = arith.constant dense<0.000000e+00> : vector<16x256xf32>
    %144 = tpu.matmul %143, %2, %cst_28 {dimension_numbers = #tpu.dot_dimension_numbers<[1], [0], [0], [1], [0, 0, 1, 1], [], []>} : vector<16x32xf32>, vector<32x256xf32>, vector<16x256xf32> -> vector<16x256xf32>
    %145 = vector.extract_strided_slice %15 {offsets = [3, 0, 0], sizes = [1, 16, 128], strides = [1, 1, 1]} : vector<8x16x128xf32> to vector<1x16x128xf32>
    %146 = vector.shape_cast %145 : vector<1x16x128xf32> to vector<16x128xf32>
    %147 = vector.extract_strided_slice %144 {offsets = [0, 0], sizes = [16, 128], strides = [1, 1]} : vector<16x256xf32> to vector<16x128xf32>
    %148 = arith.addf %146, %147 : vector<16x128xf32>
    %149 = vector.extract_strided_slice %144 {offsets = [0, 128], sizes = [16, 128], strides = [1, 1]} : vector<16x256xf32> to vector<16x128xf32>
    %cst_29 = arith.constant dense<0.000000e+00> : vector<16x128xf32>
    %150 = tpu.matmul %0, %149, %cst_29 {dimension_numbers = #tpu.dot_dimension_numbers<[1], [0], [0], [1], [0, 0, 1, 1], [], []>} : vector<16x16xf32>, vector<16x128xf32>, vector<16x128xf32> -> vector<16x128xf32>
    %151 = arith.addf %148, %150 : vector<16x128xf32>
    %152 = vector.extract_strided_slice %151 {offsets = [0, 0], sizes = [16, 32], strides = [1, 1]} : vector<16x128xf32> to vector<16x32xf32>
    %153 = vector.broadcast %5 : vector<1x32xf32> to vector<16x32xf32>
    %154 = arith.mulf %153, %132 : vector<16x32xf32>
    %155 = arith.addf %152, %154 : vector<16x32xf32>
    %156 = arith.negf %155 : vector<16x32xf32>
    %157 = math.exp %156 : vector<16x32xf32>
    %cst_30 = arith.constant 1.000000e+00 : f32
    %158 = vector.broadcast %cst_30 : f32 to vector<16x32xf32>
    %159 = arith.addf %158, %157 : vector<16x32xf32>
    %160 = arith.divf %158, %159 : vector<16x32xf32>
    %161 = vector.extract_strided_slice %151 {offsets = [0, 32], sizes = [16, 32], strides = [1, 1]} : vector<16x128xf32> to vector<16x32xf32>
    %162 = vector.broadcast %6 : vector<1x32xf32> to vector<16x32xf32>
    %163 = arith.mulf %162, %132 : vector<16x32xf32>
    %164 = arith.addf %161, %163 : vector<16x32xf32>
    %165 = arith.negf %164 : vector<16x32xf32>
    %166 = math.exp %165 : vector<16x32xf32>
    %cst_31 = arith.constant 1.000000e+00 : f32
    %167 = vector.broadcast %cst_31 : f32 to vector<16x32xf32>
    %168 = arith.addf %167, %166 : vector<16x32xf32>
    %169 = arith.divf %167, %168 : vector<16x32xf32>
    %170 = vector.extract_strided_slice %151 {offsets = [0, 64], sizes = [16, 32], strides = [1, 1]} : vector<16x128xf32> to vector<16x32xf32>
    %171 = math.tanh %170 : vector<16x32xf32>
    %172 = arith.mulf %169, %132 : vector<16x32xf32>
    %173 = arith.mulf %160, %171 : vector<16x32xf32>
    %174 = arith.addf %172, %173 : vector<16x32xf32>
    %175 = vector.extract_strided_slice %151 {offsets = [0, 96], sizes = [16, 32], strides = [1, 1]} : vector<16x128xf32> to vector<16x32xf32>
    %176 = vector.broadcast %7 : vector<1x32xf32> to vector<16x32xf32>
    %177 = arith.mulf %176, %174 : vector<16x32xf32>
    %178 = arith.addf %175, %177 : vector<16x32xf32>
    %179 = arith.negf %178 : vector<16x32xf32>
    %180 = math.exp %179 : vector<16x32xf32>
    %cst_32 = arith.constant 1.000000e+00 : f32
    %181 = vector.broadcast %cst_32 : f32 to vector<16x32xf32>
    %182 = arith.addf %181, %180 : vector<16x32xf32>
    %183 = arith.divf %181, %182 : vector<16x32xf32>
    %184 = math.tanh %174 : vector<16x32xf32>
    %185 = arith.mulf %183, %184 : vector<16x32xf32>
    %cst_33 = arith.constant dense<0.000000e+00> : vector<16x256xf32>
    %186 = tpu.matmul %185, %2, %cst_33 {dimension_numbers = #tpu.dot_dimension_numbers<[1], [0], [0], [1], [0, 0, 1, 1], [], []>} : vector<16x32xf32>, vector<32x256xf32>, vector<16x256xf32> -> vector<16x256xf32>
    %187 = vector.extract_strided_slice %15 {offsets = [4, 0, 0], sizes = [1, 16, 128], strides = [1, 1, 1]} : vector<8x16x128xf32> to vector<1x16x128xf32>
    %188 = vector.shape_cast %187 : vector<1x16x128xf32> to vector<16x128xf32>
    %189 = vector.extract_strided_slice %186 {offsets = [0, 0], sizes = [16, 128], strides = [1, 1]} : vector<16x256xf32> to vector<16x128xf32>
    %190 = arith.addf %188, %189 : vector<16x128xf32>
    %191 = vector.extract_strided_slice %186 {offsets = [0, 128], sizes = [16, 128], strides = [1, 1]} : vector<16x256xf32> to vector<16x128xf32>
    %cst_34 = arith.constant dense<0.000000e+00> : vector<16x128xf32>
    %192 = tpu.matmul %0, %191, %cst_34 {dimension_numbers = #tpu.dot_dimension_numbers<[1], [0], [0], [1], [0, 0, 1, 1], [], []>} : vector<16x16xf32>, vector<16x128xf32>, vector<16x128xf32> -> vector<16x128xf32>
    %193 = arith.addf %190, %192 : vector<16x128xf32>
    %194 = vector.extract_strided_slice %193 {offsets = [0, 0], sizes = [16, 32], strides = [1, 1]} : vector<16x128xf32> to vector<16x32xf32>
    %195 = vector.broadcast %5 : vector<1x32xf32> to vector<16x32xf32>
    %196 = arith.mulf %195, %174 : vector<16x32xf32>
    %197 = arith.addf %194, %196 : vector<16x32xf32>
    %198 = arith.negf %197 : vector<16x32xf32>
    %199 = math.exp %198 : vector<16x32xf32>
    %cst_35 = arith.constant 1.000000e+00 : f32
    %200 = vector.broadcast %cst_35 : f32 to vector<16x32xf32>
    %201 = arith.addf %200, %199 : vector<16x32xf32>
    %202 = arith.divf %200, %201 : vector<16x32xf32>
    %203 = vector.extract_strided_slice %193 {offsets = [0, 32], sizes = [16, 32], strides = [1, 1]} : vector<16x128xf32> to vector<16x32xf32>
    %204 = vector.broadcast %6 : vector<1x32xf32> to vector<16x32xf32>
    %205 = arith.mulf %204, %174 : vector<16x32xf32>
    %206 = arith.addf %203, %205 : vector<16x32xf32>
    %207 = arith.negf %206 : vector<16x32xf32>
    %208 = math.exp %207 : vector<16x32xf32>
    %cst_36 = arith.constant 1.000000e+00 : f32
    %209 = vector.broadcast %cst_36 : f32 to vector<16x32xf32>
    %210 = arith.addf %209, %208 : vector<16x32xf32>
    %211 = arith.divf %209, %210 : vector<16x32xf32>
    %212 = vector.extract_strided_slice %193 {offsets = [0, 64], sizes = [16, 32], strides = [1, 1]} : vector<16x128xf32> to vector<16x32xf32>
    %213 = math.tanh %212 : vector<16x32xf32>
    %214 = arith.mulf %211, %174 : vector<16x32xf32>
    %215 = arith.mulf %202, %213 : vector<16x32xf32>
    %216 = arith.addf %214, %215 : vector<16x32xf32>
    %217 = vector.extract_strided_slice %193 {offsets = [0, 96], sizes = [16, 32], strides = [1, 1]} : vector<16x128xf32> to vector<16x32xf32>
    %218 = vector.broadcast %7 : vector<1x32xf32> to vector<16x32xf32>
    %219 = arith.mulf %218, %216 : vector<16x32xf32>
    %220 = arith.addf %217, %219 : vector<16x32xf32>
    %221 = arith.negf %220 : vector<16x32xf32>
    %222 = math.exp %221 : vector<16x32xf32>
    %cst_37 = arith.constant 1.000000e+00 : f32
    %223 = vector.broadcast %cst_37 : f32 to vector<16x32xf32>
    %224 = arith.addf %223, %222 : vector<16x32xf32>
    %225 = arith.divf %223, %224 : vector<16x32xf32>
    %226 = math.tanh %216 : vector<16x32xf32>
    %227 = arith.mulf %225, %226 : vector<16x32xf32>
    %cst_38 = arith.constant dense<0.000000e+00> : vector<16x256xf32>
    %228 = tpu.matmul %227, %2, %cst_38 {dimension_numbers = #tpu.dot_dimension_numbers<[1], [0], [0], [1], [0, 0, 1, 1], [], []>} : vector<16x32xf32>, vector<32x256xf32>, vector<16x256xf32> -> vector<16x256xf32>
    %229 = vector.extract_strided_slice %15 {offsets = [5, 0, 0], sizes = [1, 16, 128], strides = [1, 1, 1]} : vector<8x16x128xf32> to vector<1x16x128xf32>
    %230 = vector.shape_cast %229 : vector<1x16x128xf32> to vector<16x128xf32>
    %231 = vector.extract_strided_slice %228 {offsets = [0, 0], sizes = [16, 128], strides = [1, 1]} : vector<16x256xf32> to vector<16x128xf32>
    %232 = arith.addf %230, %231 : vector<16x128xf32>
    %233 = vector.extract_strided_slice %228 {offsets = [0, 128], sizes = [16, 128], strides = [1, 1]} : vector<16x256xf32> to vector<16x128xf32>
    %cst_39 = arith.constant dense<0.000000e+00> : vector<16x128xf32>
    %234 = tpu.matmul %0, %233, %cst_39 {dimension_numbers = #tpu.dot_dimension_numbers<[1], [0], [0], [1], [0, 0, 1, 1], [], []>} : vector<16x16xf32>, vector<16x128xf32>, vector<16x128xf32> -> vector<16x128xf32>
    %235 = arith.addf %232, %234 : vector<16x128xf32>
    %236 = vector.extract_strided_slice %235 {offsets = [0, 0], sizes = [16, 32], strides = [1, 1]} : vector<16x128xf32> to vector<16x32xf32>
    %237 = vector.broadcast %5 : vector<1x32xf32> to vector<16x32xf32>
    %238 = arith.mulf %237, %216 : vector<16x32xf32>
    %239 = arith.addf %236, %238 : vector<16x32xf32>
    %240 = arith.negf %239 : vector<16x32xf32>
    %241 = math.exp %240 : vector<16x32xf32>
    %cst_40 = arith.constant 1.000000e+00 : f32
    %242 = vector.broadcast %cst_40 : f32 to vector<16x32xf32>
    %243 = arith.addf %242, %241 : vector<16x32xf32>
    %244 = arith.divf %242, %243 : vector<16x32xf32>
    %245 = vector.extract_strided_slice %235 {offsets = [0, 32], sizes = [16, 32], strides = [1, 1]} : vector<16x128xf32> to vector<16x32xf32>
    %246 = vector.broadcast %6 : vector<1x32xf32> to vector<16x32xf32>
    %247 = arith.mulf %246, %216 : vector<16x32xf32>
    %248 = arith.addf %245, %247 : vector<16x32xf32>
    %249 = arith.negf %248 : vector<16x32xf32>
    %250 = math.exp %249 : vector<16x32xf32>
    %cst_41 = arith.constant 1.000000e+00 : f32
    %251 = vector.broadcast %cst_41 : f32 to vector<16x32xf32>
    %252 = arith.addf %251, %250 : vector<16x32xf32>
    %253 = arith.divf %251, %252 : vector<16x32xf32>
    %254 = vector.extract_strided_slice %235 {offsets = [0, 64], sizes = [16, 32], strides = [1, 1]} : vector<16x128xf32> to vector<16x32xf32>
    %255 = math.tanh %254 : vector<16x32xf32>
    %256 = arith.mulf %253, %216 : vector<16x32xf32>
    %257 = arith.mulf %244, %255 : vector<16x32xf32>
    %258 = arith.addf %256, %257 : vector<16x32xf32>
    %259 = vector.extract_strided_slice %235 {offsets = [0, 96], sizes = [16, 32], strides = [1, 1]} : vector<16x128xf32> to vector<16x32xf32>
    %260 = vector.broadcast %7 : vector<1x32xf32> to vector<16x32xf32>
    %261 = arith.mulf %260, %258 : vector<16x32xf32>
    %262 = arith.addf %259, %261 : vector<16x32xf32>
    %263 = arith.negf %262 : vector<16x32xf32>
    %264 = math.exp %263 : vector<16x32xf32>
    %cst_42 = arith.constant 1.000000e+00 : f32
    %265 = vector.broadcast %cst_42 : f32 to vector<16x32xf32>
    %266 = arith.addf %265, %264 : vector<16x32xf32>
    %267 = arith.divf %265, %266 : vector<16x32xf32>
    %268 = math.tanh %258 : vector<16x32xf32>
    %269 = arith.mulf %267, %268 : vector<16x32xf32>
    %cst_43 = arith.constant dense<0.000000e+00> : vector<16x256xf32>
    %270 = tpu.matmul %269, %2, %cst_43 {dimension_numbers = #tpu.dot_dimension_numbers<[1], [0], [0], [1], [0, 0, 1, 1], [], []>} : vector<16x32xf32>, vector<32x256xf32>, vector<16x256xf32> -> vector<16x256xf32>
    %271 = vector.extract_strided_slice %15 {offsets = [6, 0, 0], sizes = [1, 16, 128], strides = [1, 1, 1]} : vector<8x16x128xf32> to vector<1x16x128xf32>
    %272 = vector.shape_cast %271 : vector<1x16x128xf32> to vector<16x128xf32>
    %273 = vector.extract_strided_slice %270 {offsets = [0, 0], sizes = [16, 128], strides = [1, 1]} : vector<16x256xf32> to vector<16x128xf32>
    %274 = arith.addf %272, %273 : vector<16x128xf32>
    %275 = vector.extract_strided_slice %270 {offsets = [0, 128], sizes = [16, 128], strides = [1, 1]} : vector<16x256xf32> to vector<16x128xf32>
    %cst_44 = arith.constant dense<0.000000e+00> : vector<16x128xf32>
    %276 = tpu.matmul %0, %275, %cst_44 {dimension_numbers = #tpu.dot_dimension_numbers<[1], [0], [0], [1], [0, 0, 1, 1], [], []>} : vector<16x16xf32>, vector<16x128xf32>, vector<16x128xf32> -> vector<16x128xf32>
    %277 = arith.addf %274, %276 : vector<16x128xf32>
    %278 = vector.extract_strided_slice %277 {offsets = [0, 0], sizes = [16, 32], strides = [1, 1]} : vector<16x128xf32> to vector<16x32xf32>
    %279 = vector.broadcast %5 : vector<1x32xf32> to vector<16x32xf32>
    %280 = arith.mulf %279, %258 : vector<16x32xf32>
    %281 = arith.addf %278, %280 : vector<16x32xf32>
    %282 = arith.negf %281 : vector<16x32xf32>
    %283 = math.exp %282 : vector<16x32xf32>
    %cst_45 = arith.constant 1.000000e+00 : f32
    %284 = vector.broadcast %cst_45 : f32 to vector<16x32xf32>
    %285 = arith.addf %284, %283 : vector<16x32xf32>
    %286 = arith.divf %284, %285 : vector<16x32xf32>
    %287 = vector.extract_strided_slice %277 {offsets = [0, 32], sizes = [16, 32], strides = [1, 1]} : vector<16x128xf32> to vector<16x32xf32>
    %288 = vector.broadcast %6 : vector<1x32xf32> to vector<16x32xf32>
    %289 = arith.mulf %288, %258 : vector<16x32xf32>
    %290 = arith.addf %287, %289 : vector<16x32xf32>
    %291 = arith.negf %290 : vector<16x32xf32>
    %292 = math.exp %291 : vector<16x32xf32>
    %cst_46 = arith.constant 1.000000e+00 : f32
    %293 = vector.broadcast %cst_46 : f32 to vector<16x32xf32>
    %294 = arith.addf %293, %292 : vector<16x32xf32>
    %295 = arith.divf %293, %294 : vector<16x32xf32>
    %296 = vector.extract_strided_slice %277 {offsets = [0, 64], sizes = [16, 32], strides = [1, 1]} : vector<16x128xf32> to vector<16x32xf32>
    %297 = math.tanh %296 : vector<16x32xf32>
    %298 = arith.mulf %295, %258 : vector<16x32xf32>
    %299 = arith.mulf %286, %297 : vector<16x32xf32>
    %300 = arith.addf %298, %299 : vector<16x32xf32>
    %301 = vector.extract_strided_slice %277 {offsets = [0, 96], sizes = [16, 32], strides = [1, 1]} : vector<16x128xf32> to vector<16x32xf32>
    %302 = vector.broadcast %7 : vector<1x32xf32> to vector<16x32xf32>
    %303 = arith.mulf %302, %300 : vector<16x32xf32>
    %304 = arith.addf %301, %303 : vector<16x32xf32>
    %305 = arith.negf %304 : vector<16x32xf32>
    %306 = math.exp %305 : vector<16x32xf32>
    %cst_47 = arith.constant 1.000000e+00 : f32
    %307 = vector.broadcast %cst_47 : f32 to vector<16x32xf32>
    %308 = arith.addf %307, %306 : vector<16x32xf32>
    %309 = arith.divf %307, %308 : vector<16x32xf32>
    %310 = math.tanh %300 : vector<16x32xf32>
    %311 = arith.mulf %309, %310 : vector<16x32xf32>
    %cst_48 = arith.constant dense<0.000000e+00> : vector<16x256xf32>
    %312 = tpu.matmul %311, %2, %cst_48 {dimension_numbers = #tpu.dot_dimension_numbers<[1], [0], [0], [1], [0, 0, 1, 1], [], []>} : vector<16x32xf32>, vector<32x256xf32>, vector<16x256xf32> -> vector<16x256xf32>
    %313 = vector.extract_strided_slice %15 {offsets = [7, 0, 0], sizes = [1, 16, 128], strides = [1, 1, 1]} : vector<8x16x128xf32> to vector<1x16x128xf32>
    %314 = vector.shape_cast %313 : vector<1x16x128xf32> to vector<16x128xf32>
    %315 = vector.extract_strided_slice %312 {offsets = [0, 0], sizes = [16, 128], strides = [1, 1]} : vector<16x256xf32> to vector<16x128xf32>
    %316 = arith.addf %314, %315 : vector<16x128xf32>
    %317 = vector.extract_strided_slice %312 {offsets = [0, 128], sizes = [16, 128], strides = [1, 1]} : vector<16x256xf32> to vector<16x128xf32>
    %cst_49 = arith.constant dense<0.000000e+00> : vector<16x128xf32>
    %318 = tpu.matmul %0, %317, %cst_49 {dimension_numbers = #tpu.dot_dimension_numbers<[1], [0], [0], [1], [0, 0, 1, 1], [], []>} : vector<16x16xf32>, vector<16x128xf32>, vector<16x128xf32> -> vector<16x128xf32>
    %319 = arith.addf %316, %318 : vector<16x128xf32>
    %320 = vector.extract_strided_slice %319 {offsets = [0, 0], sizes = [16, 32], strides = [1, 1]} : vector<16x128xf32> to vector<16x32xf32>
    %321 = vector.broadcast %5 : vector<1x32xf32> to vector<16x32xf32>
    %322 = arith.mulf %321, %300 : vector<16x32xf32>
    %323 = arith.addf %320, %322 : vector<16x32xf32>
    %324 = arith.negf %323 : vector<16x32xf32>
    %325 = math.exp %324 : vector<16x32xf32>
    %cst_50 = arith.constant 1.000000e+00 : f32
    %326 = vector.broadcast %cst_50 : f32 to vector<16x32xf32>
    %327 = arith.addf %326, %325 : vector<16x32xf32>
    %328 = arith.divf %326, %327 : vector<16x32xf32>
    %329 = vector.extract_strided_slice %319 {offsets = [0, 32], sizes = [16, 32], strides = [1, 1]} : vector<16x128xf32> to vector<16x32xf32>
    %330 = vector.broadcast %6 : vector<1x32xf32> to vector<16x32xf32>
    %331 = arith.mulf %330, %300 : vector<16x32xf32>
    %332 = arith.addf %329, %331 : vector<16x32xf32>
    %333 = arith.negf %332 : vector<16x32xf32>
    %334 = math.exp %333 : vector<16x32xf32>
    %cst_51 = arith.constant 1.000000e+00 : f32
    %335 = vector.broadcast %cst_51 : f32 to vector<16x32xf32>
    %336 = arith.addf %335, %334 : vector<16x32xf32>
    %337 = arith.divf %335, %336 : vector<16x32xf32>
    %338 = vector.extract_strided_slice %319 {offsets = [0, 64], sizes = [16, 32], strides = [1, 1]} : vector<16x128xf32> to vector<16x32xf32>
    %339 = math.tanh %338 : vector<16x32xf32>
    %340 = arith.mulf %337, %300 : vector<16x32xf32>
    %341 = arith.mulf %328, %339 : vector<16x32xf32>
    %342 = arith.addf %340, %341 : vector<16x32xf32>
    %343 = vector.extract_strided_slice %319 {offsets = [0, 96], sizes = [16, 32], strides = [1, 1]} : vector<16x128xf32> to vector<16x32xf32>
    %344 = vector.broadcast %7 : vector<1x32xf32> to vector<16x32xf32>
    %345 = arith.mulf %344, %342 : vector<16x32xf32>
    %346 = arith.addf %343, %345 : vector<16x32xf32>
    %347 = arith.negf %346 : vector<16x32xf32>
    %348 = math.exp %347 : vector<16x32xf32>
    %cst_52 = arith.constant 1.000000e+00 : f32
    %349 = vector.broadcast %cst_52 : f32 to vector<16x32xf32>
    %350 = arith.addf %349, %348 : vector<16x32xf32>
    %351 = arith.divf %349, %350 : vector<16x32xf32>
    %352 = math.tanh %342 : vector<16x32xf32>
    %353 = arith.mulf %351, %352 : vector<16x32xf32>
    %c0_53 = arith.constant 0 : index
    %c0_54 = arith.constant 0 : index
    %354 = vector.load %arg6[%c0_53, %c0_54] : memref<16x32xf32, #tpu.memory_space<vmem>>, vector<16x32xf32>
    tpu.vector_store %arg6[%c0_53, %c0_54], %353 {strides = array<i32>} : memref<16x32xf32, #tpu.memory_space<vmem>>, vector<16x32xf32>,
    return
  }
}

</mosaic_0001>

<llo_original>
// kernel: tpu_custom_call.1
$region0: #{tpu_custom_call.1}
  #allocation0 [shape = 'u32[]', space=smem, size = 0x4, offset = 0x4, fixed_abs, tag = 'smem constant byte address 0x4 - core index']
  #allocation1 [shape = 'u32[144,128]{1,0:T(1,128)}', space=vmem, size = 0x12000, scoped, tag = 'internal scratch']
  %s0 = inlined_call_operand.vmem [shape: f32[8,16,1], index: 0, kind: input, shape index: {}]
  %s1 = inlined_call_operand.vmem [shape: f32[16,16], index: 1, kind: input, shape index: {}]
  %s2 = inlined_call_operand.vmem [shape: f32[1,128], index: 2, kind: input, shape index: {}]
  %s3 = inlined_call_operand.vmem [shape: f32[32,256], index: 3, kind: input, shape index: {}]
  %s4 = inlined_call_operand.vmem [shape: f32[1,128], index: 4, kind: input, shape index: {}]
  %s5 = inlined_call_operand.vmem [shape: f32[1,96], index: 5, kind: input, shape index: {}]
  %s6 = inlined_call_operand.hbm [shape: f32[16,32], index: 6, kind: output, shape index: {}]
  %s7 = sld [smem:[#allocation0]]
  $region34: #{tpu_custom_call.1} parent=0
    _
  %s9 = ssub.s32 1, %s7
  %s10 = scalar_select 0, %s9, %s7
  $region1: #{tpu_custom_call.1} parent=0
    #allocation2 [shape = 'u8[8192]{0}', space=vmem, size = 0x2000, scoped, tag = 'output window, operand 0, single buffered']
    #allocation3 [shape = 's32[1]{0}', space=sflag, size = 0x4, scoped, tag = 'scoped memory for tpu_custom_call.1']
    %11 = vsyncpa [#allocation3], 0
    // Predicated region
    $region2: #{tpu_custom_call.1} parent=1 // pred_check
      _
    $region3: #{tpu_custom_call.1} parent=1 // pred_check_branch
      %13 = sbr.rel (0) target = $region5
    $region4: #{tpu_custom_call.1} parent=1 // pred_region
      _
    $region5: #{tpu_custom_call.1} parent=1 // pred_fallthru
      _
    // Predicated region
    $region6: #{tpu_custom_call.1} parent=1 // pred_check
      _
    $region7: #{tpu_custom_call.1} parent=1 // pred_check_branch
      %15 = sbr.rel (0) target = $region9
    $region8: #{tpu_custom_call.1} parent=1 // pred_region
      _
    $region9: #{tpu_custom_call.1} parent=1 // pred_fallthru
      _
    // Predicated region
    $region10: #{tpu_custom_call.1} parent=1 // pred_check
      _
    $region11: #{tpu_custom_call.1} parent=1 // pred_check_branch
      %17 = sbr.rel (0) target = $region13
    $region12: #{tpu_custom_call.1} parent=1 // pred_region
      _
    $region13: #{tpu_custom_call.1} parent=1 // pred_fallthru
      _
    // Predicated region
    $region14: #{tpu_custom_call.1} parent=1 // pred_check
      _
    $region15: #{tpu_custom_call.1} parent=1 // pred_check_branch
      %19 = sbr.rel (0) target = $region17
    $region16: #{tpu_custom_call.1} parent=1 // pred_region
      _
    $region17: #{tpu_custom_call.1} parent=1 // pred_fallthru
      _
    // Predicated region
    $region18: #{tpu_custom_call.1} parent=1 // pred_check
      _
    $region19: #{tpu_custom_call.1} parent=1 // pred_check_branch
      %21 = sbr.rel (0) target = $region21
    $region20: #{tpu_custom_call.1} parent=1 // pred_region
      _
    $region21: #{tpu_custom_call.1} parent=1 // pred_fallthru
      _
    // Predicated region
    $region22: #{tpu_custom_call.1} parent=1 // pred_check
      _
    $region23: #{tpu_custom_call.1} parent=1 // pred_check_branch
      %23 = sbr.rel (0) target = $region25
    $region24: #{tpu_custom_call.1} parent=1 // pred_region
      _
    $region25: #{tpu_custom_call.1} parent=1 // pred_fallthru
      _
    %v24 = vld [vmem:[%s1] sm:$0xff]
    %v25 = vld [vmem:[%s1 + $0x8] sm:$0xff]
    %v26 = vld [vmem:[%s2] sm:$0x1]
    %v27 = vld [vmem:[%s3] sm:$0xff]
    %v28 = vld [vmem:[%s3 + $0x8] sm:$0xff]
    %v29 = vld [vmem:[%s3 + $0x10] sm:$0xff]
    %v30 = vld [vmem:[%s3 + $0x18] sm:$0xff]
    %v31 = vld [vmem:[%s3 + $0x20] sm:$0xff]
    %v32 = vld [vmem:[%s3 + $0x28] sm:$0xff]
    %v33 = vld [vmem:[%s3 + $0x30] sm:$0xff]
    %v34 = vld [vmem:[%s3 + $0x38] sm:$0xff]
    %v35 = vld [vmem:[%s4] sm:$0x1]
    %v36 = vld [vmem:[%s5] sm:$0x1]
    %v37 = vld [vmem:[%s0] sm:$0xff]
    %v38 = vld [vmem:[%s0 + $0x8] sm:$0xff]
    %v39 = vld [vmem:[%s0 + $0x10] sm:$0xff]
    %v40 = vld [vmem:[%s0 + $0x18] sm:$0xff]
    %v41 = vld [vmem:[%s0 + $0x20] sm:$0xff]
    %v42 = vld [vmem:[%s0 + $0x28] sm:$0xff]
    %v43 = vld [vmem:[%s0 + $0x30] sm:$0xff]
    %v44 = vld [vmem:[%s0 + $0x38] sm:$0xff]
    %v45 = vld [vmem:[%s0 + $0x40] sm:$0xff]
    %v46 = vld [vmem:[%s0 + $0x48] sm:$0xff]
    %v47 = vld [vmem:[%s0 + $0x50] sm:$0xff]
    %v48 = vld [vmem:[%s0 + $0x58] sm:$0xff]
    %v49 = vld [vmem:[%s0 + $0x60] sm:$0xff]
    %v50 = vld [vmem:[%s0 + $0x68] sm:$0xff]
    %v51 = vld [vmem:[%s0 + $0x70] sm:$0xff]
    %v52 = vld [vmem:[%s0 + $0x78] sm:$0xff]
    %54 = vset.pattern.permute.xlu0 0
    %55 = vperm.xlu0 %54, %v37
    %v56 = vpop.permute.xlu0 %55
    %59 = vset.pattern.permute.xlu0 0
    %60 = vperm.xlu0 %59, %v38
    %v61 = vpop.permute.xlu0 %60
    %64 = vset.pattern.permute.xlu0 0
    %65 = vperm.xlu0 %64, %v39
    %v66 = vpop.permute.xlu0 %65
    %69 = vset.pattern.permute.xlu0 0
    %70 = vperm.xlu0 %69, %v40
    %v71 = vpop.permute.xlu0 %70
    %74 = vset.pattern.permute.xlu0 0
    %75 = vperm.xlu0 %74, %v41
    %v76 = vpop.permute.xlu0 %75
    %79 = vset.pattern.permute.xlu0 0
    %80 = vperm.xlu0 %79, %v42
    %v81 = vpop.permute.xlu0 %80
    %84 = vset.pattern.permute.xlu0 0
    %85 = vperm.xlu0 %84, %v43
    %v86 = vpop.permute.xlu0 %85
    %89 = vset.pattern.permute.xlu0 0
    %90 = vperm.xlu0 %89, %v44
    %v91 = vpop.permute.xlu0 %90
    %94 = vset.pattern.permute.xlu0 0
    %95 = vperm.xlu0 %94, %v45
    %v96 = vpop.permute.xlu0 %95
    %99 = vset.pattern.permute.xlu0 0
    %100 = vperm.xlu0 %99, %v46
    %v101 = vpop.permute.xlu0 %100
    %104 = vset.pattern.permute.xlu0 0
    %105 = vperm.xlu0 %104, %v47
    %v106 = vpop.permute.xlu0 %105
    %109 = vset.pattern.permute.xlu0 0
    %110 = vperm.xlu0 %109, %v48
    %v111 = vpop.permute.xlu0 %110
    %114 = vset.pattern.permute.xlu0 0
    %115 = vperm.xlu0 %114, %v49
    %v116 = vpop.permute.xlu0 %115
    %119 = vset.pattern.permute.xlu0 0
    %120 = vperm.xlu0 %119, %v50
    %v121 = vpop.permute.xlu0 %120
    %124 = vset.pattern.permute.xlu0 0
    %125 = vperm.xlu0 %124, %v51
    %v126 = vpop.permute.xlu0 %125
    %129 = vset.pattern.permute.xlu0 0
    %130 = vperm.xlu0 %129, %v52
    %v131 = vpop.permute.xlu0 %130
    %v134 = vlaneseq
    %v135 = vshrl.u32 %v134, 7
    %v136 = vsub.s32 0, %v135
    %v137 = vrot.slane %v26, %v136
    %v139 = vmul.f32 %v56, %v137
    %v140 = vmul.f32 %v61, %v137
    %v141 = vmul.f32 %v66, %v137
    %v142 = vmul.f32 %v71, %v137
    %v143 = vmul.f32 %v76, %v137
    %v144 = vmul.f32 %v81, %v137
    %v145 = vmul.f32 %v86, %v137
    %v146 = vmul.f32 %v91, %v137
    %v147 = vmul.f32 %v96, %v137
    %v148 = vmul.f32 %v101, %v137
    %v149 = vmul.f32 %v106, %v137
    %v150 = vmul.f32 %v111, %v137
    %v151 = vmul.f32 %v116, %v137
    %v152 = vmul.f32 %v121, %v137
    %v153 = vmul.f32 %v126, %v137
    %v154 = vmul.f32 %v131, %v137
    %v156 = vlaneseq
    %v157 = vshrl.u32 %v156, 7
    %v158 = vsub.s32 0, %v157
    %v159 = vrot.slane %v35, %v158
    %v161 = vadd.f32 %v139, %v159
    %v162 = vadd.f32 %v140, %v159
    %v163 = vadd.f32 %v141, %v159
    %v164 = vadd.f32 %v142, %v159
    %v165 = vadd.f32 %v143, %v159
    %v166 = vadd.f32 %v144, %v159
    %v167 = vadd.f32 %v145, %v159
    %v168 = vadd.f32 %v146, %v159
    %v169 = vadd.f32 %v147, %v159
    %v170 = vadd.f32 %v148, %v159
    %v171 = vadd.f32 %v149, %v159
    %v172 = vadd.f32 %v150, %v159
    %v173 = vadd.f32 %v151, %v159
    %v174 = vadd.f32 %v152, %v159
    %v175 = vadd.f32 %v153, %v159
    %v176 = vadd.f32 %v154, %v159
    %vm177 = vcmask 261120
    %v179 = vsel %vm177, 0.0, 0
    %181 = vmatprep.subr.mxu0 0.0
    %182 = vmatpush1.msra.mxu0 0.0
    %183 = vmatprep.subr.mxu0 0.0
    %184 = vmatpush1.msra.mxu0 0.0
    %185 = vmatprep.subr.mxu0 0.0
    %186 = vmatpush1.msra.mxu0 0.0
    %187 = vmatprep.subr.mxu0 0.0
    %188 = vmatpush1.msra.mxu0 0.0
    %189 = vmatprep.subr.mxu0 0.0
    %190 = vmatpush1.msra.mxu0 0.0
    %191 = vmatprep.subr.mxu0 0.0
    %192 = vmatpush1.msra.mxu0 0.0
    %193 = vmatprep.subr.mxu0 0.0
    %194 = vmatpush1.msra.mxu0 0.0
    %195 = vmatprep.subr.mxu0 0.0
    %196 = vmatpush1.msra.mxu0 0.0
    %197 = vmatprep.subr.mxu0 0.0
    %198 = vmatpush1.msra.mxu0 0.0
    %199 = vmatprep.subr.mxu0 0.0
    %200 = vmatpush1.msra.mxu0 0.0
    %201 = vmatprep.subr.mxu0 0.0
    %202 = vmatpush1.msra.mxu0 0.0
    %203 = vmatprep.subr.mxu0 0.0
    %204 = vmatpush1.msra.mxu0 0.0
    %205 = vmatprep.subr.mxu0 %v34
    %206 = vmatpush1.msra.mxu0 %v33
    %207 = vmatprep.subr.mxu0 %v32
    %208 = vmatpush1.msra.mxu0 %v31
    %209 = vmatprep.subr.mxu0 %v30
    %210 = vmatpush1.msra.mxu0 %v29
    %211 = vmatprep.subr.mxu0 %v28
    %212 = vmatpush1.msra.mxu0 %v27
    %213 = vmatprep.subr.mxu0 0.0
    %214 = vmatpush2.msra.mxu0 0.0
    %215 = vmatprep.subr.mxu0 0.0
    %216 = vmatpush2.msra.mxu0 0.0
    %217 = vmatprep.subr.mxu0 0.0
    %218 = vmatpush2.msra.mxu0 0.0
    %219 = vmatprep.subr.mxu0 0.0
    %220 = vmatpush2.msra.mxu0 0.0
    %221 = vmatprep.subr.mxu0 0.0
    %222 = vmatpush2.msra.mxu0 0.0
    %223 = vmatprep.subr.mxu0 0.0
    %224 = vmatpush2.msra.mxu0 0.0
    %225 = vmatprep.subr.mxu0 0.0
    %226 = vmatpush2.msra.mxu0 0.0
    %227 = vmatprep.subr.mxu0 0.0
    %228 = vmatpush2.msra.mxu0 0.0
    %229 = vmatprep.subr.mxu0 0.0
    %230 = vmatpush2.msra.mxu0 0.0
    %231 = vmatprep.subr.mxu0 0.0
    %232 = vmatpush2.msra.mxu0 0.0
    %233 = vmatprep.subr.mxu0 0.0
    %234 = vmatpush2.msra.mxu0 0.0
    %235 = vmatprep.subr.mxu0 0.0
    %236 = vmatpush2.msra.mxu0 0.0
    %237 = vmatprep.subr.mxu0 0.0
    %238 = vmatpush2.msra.mxu0 0.0
    %239 = vmatprep.subr.mxu0 0.0
    %240 = vmatpush2.msra.mxu0 0.0
    %241 = vmatprep.subr.mxu0 0.0
    %242 = vmatpush2.msra.mxu0 0.0
    %243 = vmatprep.subr.mxu0 0.0
    %244 = vmatpush2.msra.mxu0 0.0
    %245 = vmatprep.mubr.f32.mxu0 0.0
    %246 = vmatmul.mubr.f32.gmra.mxu0 %v179
    %v247 = vpop.f32.mrf.mxu0
    %v248 = vadd.f32 0.0, %v247
    %v249 = vpop.f32.mrf.mxu0
    %v250 = vadd.f32 0.0, %v249
    %251 = vmatprep.mubr.f32.mxu0 0.0
    %252 = vmatmul.mubr.f32.gmra.mxu0 %v179
    %v253 = vpop.f32.mrf.mxu0
    %v254 = vadd.f32 0.0, %v253
    %v255 = vpop.f32.mrf.mxu0
    %v256 = vadd.f32 0.0, %v255
    %257 = vdwg.mxu0
    %v258 = vadd.f32 %v161, %v248
    %v259 = vadd.f32 %v162, %v254
    %vm260 = vcmask 130048
    %v262 = vsel %vm260, %v24, 0
    %v265 = vsel %vm260, %v25, 0
    %267 = vmatprep.subr.mxu0 0.0
    %268 = vmatpush1.msra.mxu0 0.0
    %269 = vmatprep.subr.mxu0 0.0
    %270 = vmatpush1.msra.mxu0 0.0
    %271 = vmatprep.subr.mxu0 0.0
    %272 = vmatpush1.msra.mxu0 0.0
    %273 = vmatprep.subr.mxu0 0.0
    %274 = vmatpush1.msra.mxu0 0.0
    %275 = vmatprep.subr.mxu0 0.0
    %276 = vmatpush1.msra.mxu0 0.0
    %277 = vmatprep.subr.mxu0 0.0
    %278 = vmatpush1.msra.mxu0 0.0
    %279 = vmatprep.subr.mxu0 0.0
    %280 = vmatpush1.msra.mxu0 0.0
    %281 = vmatprep.subr.mxu0 0.0
    %282 = vmatpush1.msra.mxu0 0.0
    %283 = vmatprep.subr.mxu0 0.0
    %284 = vmatpush1.msra.mxu0 0.0
    %285 = vmatprep.subr.mxu0 0.0
    %286 = vmatpush1.msra.mxu0 0.0
    %287 = vmatprep.subr.mxu0 0.0
    %288 = vmatpush1.msra.mxu0 0.0
    %289 = vmatprep.subr.mxu0 0.0
    %290 = vmatpush1.msra.mxu0 0.0
    %291 = vmatprep.subr.mxu0 0.0
    %292 = vmatpush1.msra.mxu0 0.0
    %293 = vmatprep.subr.mxu0 0.0
    %294 = vmatpush1.msra.mxu0 0.0
    %295 = vmatprep.subr.mxu0 0.0
    %296 = vmatpush1.msra.mxu0 %v256
    %297 = vmatprep.subr.mxu0 0.0
    %298 = vmatpush1.msra.mxu0 %v250
    %299 = vmatprep.subr.mxu0 0.0
    %300 = vmatpush2.msra.mxu0 0.0
    %301 = vmatprep.subr.mxu0 0.0
    %302 = vmatpush2.msra.mxu0 0.0
    %303 = vmatprep.subr.mxu0 0.0
    %304 = vmatpush2.msra.mxu0 0.0
    %305 = vmatprep.subr.mxu0 0.0
    %306 = vmatpush2.msra.mxu0 0.0
    %307 = vmatprep.subr.mxu0 0.0
    %308 = vmatpush2.msra.mxu0 0.0
    %309 = vmatprep.subr.mxu0 0.0
    %310 = vmatpush2.msra.mxu0 0.0
    %311 = vmatprep.subr.mxu0 0.0
    %312 = vmatpush2.msra.mxu0 0.0
    %313 = vmatprep.subr.mxu0 0.0
    %314 = vmatpush2.msra.mxu0 0.0
    %315 = vmatprep.subr.mxu0 0.0
    %316 = vmatpush2.msra.mxu0 0.0
    %317 = vmatprep.subr.mxu0 0.0
    %318 = vmatpush2.msra.mxu0 0.0
    %319 = vmatprep.subr.mxu0 0.0
    %320 = vmatpush2.msra.mxu0 0.0
    %321 = vmatprep.subr.mxu0 0.0
    %322 = vmatpush2.msra.mxu0 0.0
    %323 = vmatprep.subr.mxu0 0.0
    %324 = vmatpush2.msra.mxu0 0.0
    %325 = vmatprep.subr.mxu0 0.0
    %326 = vmatpush2.msra.mxu0 0.0
    %327 = vmatprep.subr.mxu0 0.0
    %328 = vmatpush2.msra.mxu0 0.0
    %329 = vmatprep.subr.mxu0 0.0
    %330 = vmatpush2.msra.mxu0 0.0
    %331 = vmatprep.mubr.f32.mxu0 0.0
    %332 = vmatmul.mubr.f32.gmra.mxu0 %v262
    %v333 = vpop.f32.mrf.mxu0
    %v334 = vadd.f32 0.0, %v333
    %v335 = vpop.f32.mrf.mxu0
    %336 = vmatprep.mubr.f32.mxu0 0.0
    %337 = vmatmul.mubr.f32.gmra.mxu0 %v265
    %v338 = vpop.f32.mrf.mxu0
    %v339 = vadd.f32 0.0, %v338
    %v340 = vpop.f32.mrf.mxu0
    %341 = vdwg.mxu0
    %v342 = vadd.f32 %v258, %v334
    %v343 = vadd.f32 %v259, %v339
    %v345 = vlaneseq
    %v346 = vshrl.u32 %v345, 7
    %v347 = vsub.s32 0, %v346
    %v348 = vrot.slane %v36, %v347
    %v350 = vmul.f32 %v348, 0.0
    %v351 = vadd.f32 %v342, %v350
    %v352 = vadd.f32 %v343, %v350
    %v353 = vxor.u32 %v351, 2147483648
    %v354 = vxor.u32 %v352, 2147483648
    %v355 = vmul.f32 %v353, 1.442695
    %v356 = vpow.pop %v355
    %v357 = vmul.f32 %v354, 1.442695
    %v358 = vpow.pop %v357
    %v359 = vadd.f32 %v356, 1.0
    %v360 = vadd.f32 %v358, 1.0
    %v361 = vrcp.pop %v359
    %v362 = vmul.f32 1.0, %v361
    %v363 = vrcp.pop %v360
    %v364 = vmul.f32 1.0, %v363
    %v365 = vtanh.pop %v342
    %v366 = vtanh.pop %v343
    %v367 = vmul.f32 %v362, 0.0
    %v368 = vmul.f32 %v364, 0.0
    %371 = vrot.lane.b32.xlu0 %v365, 64
    %v372 = vpop.permute.xlu0 %371
    %373 = vrot.lane.b32.xlu0 %v366, 64
    %v374 = vpop.permute.xlu0 %373
    %v377 = vmul.f32 %v362, %v372
    %v378 = vmul.f32 %v364, %v374
    %381 = vrot.lane.b32.xlu0 %v377, 32
    %v382 = vpop.permute.xlu0 %381
    %383 = vrot.lane.b32.xlu0 %v378, 32
    %v384 = vpop.permute.xlu0 %383
    %v387 = vadd.f32 %v367, %v382
    %v388 = vadd.f32 %v368, %v384
    %391 = vrot.lane.b32.xlu0 %v387, 32
    %v392 = vpop.permute.xlu0 %391
    %393 = vrot.lane.b32.xlu0 %v388, 32
    %v394 = vpop.permute.xlu0 %393
    %v397 = vmul.f32 %v348, %v392
    %v398 = vmul.f32 %v348, %v394
    %401 = vrot.lane.b32.xlu0 %v397, 32
    %v402 = vpop.permute.xlu0 %401
    %403 = vrot.lane.b32.xlu0 %v398, 32
    %v404 = vpop.permute.xlu0 %403
    %v407 = vadd.f32 %v342, %v402
    %v408 = vadd.f32 %v343, %v404
    %v409 = vxor.u32 %v407, 2147483648
    %v410 = vxor.u32 %v408, 2147483648
    %v411 = vmul.f32 %v409, 1.442695
    %v412 = vpow.pop %v411
    %v413 = vmul.f32 %v410, 1.442695
    %v414 = vpow.pop %v413
    %v415 = vadd.f32 %v412, 1.0
    %v416 = vadd.f32 %v414, 1.0
    %v417 = vrcp.pop %v415
    %v418 = vmul.f32 1.0, %v417
    %v419 = vrcp.pop %v416
    %v420 = vmul.f32 1.0, %v419
    %v421 = vtanh.pop %v387
    %v422 = vtanh.pop %v388
    %425 = vrot.lane.b32.xlu0 %v421, 64
    %v426 = vpop.permute.xlu0 %425
    %427 = vrot.lane.b32.xlu0 %v422, 64
    %v428 = vpop.permute.xlu0 %427
    %v431 = vmul.f32 %v418, %v426
    %v432 = vmul.f32 %v420, %v428
    %435 = vrot.lane.b32.xlu0 %v431, 32
    %v436 = vpop.permute.xlu0 %435
    %437 = vrot.lane.b32.xlu0 %v432, 32
    %v438 = vpop.permute.xlu0 %437
    %v439 = vsel %vm177, %v436, 0
    %v441 = vsel %vm177, %v438, 0
    %443 = vmatprep.subr.mxu0 0.0
    %444 = vmatpush1.msra.mxu0 0.0
    %445 = vmatprep.subr.mxu0 0.0
    %446 = vmatpush1.msra.mxu0 0.0
    %447 = vmatprep.subr.mxu0 0.0
    %448 = vmatpush1.msra.mxu0 0.0
    %449 = vmatprep.subr.mxu0 0.0
    %450 = vmatpush1.msra.mxu0 0.0
    %451 = vmatprep.subr.mxu0 0.0
    %452 = vmatpush1.msra.mxu0 0.0
    %453 = vmatprep.subr.mxu0 0.0
    %454 = vmatpush1.msra.mxu0 0.0
    %455 = vmatprep.subr.mxu0 0.0
    %456 = vmatpush1.msra.mxu0 0.0
    %457 = vmatprep.subr.mxu0 0.0
    %458 = vmatpush1.msra.mxu0 0.0
    %459 = vmatprep.subr.mxu0 0.0
    %460 = vmatpush1.msra.mxu0 0.0
    %461 = vmatprep.subr.mxu0 0.0
    %462 = vmatpush1.msra.mxu0 0.0
    %463 = vmatprep.subr.mxu0 0.0
    %464 = vmatpush1.msra.mxu0 0.0
    %465 = vmatprep.subr.mxu0 0.0
    %466 = vmatpush1.msra.mxu0 0.0
    %467 = vmatprep.subr.mxu0 %v34
    %468 = vmatpush1.msra.mxu0 %v33
    %469 = vmatprep.subr.mxu0 %v32
    %470 = vmatpush1.msra.mxu0 %v31
    %471 = vmatprep.subr.mxu0 %v30
    %472 = vmatpush1.msra.mxu0 %v29
    %473 = vmatprep.subr.mxu0 %v28
    %474 = vmatpush1.msra.mxu0 %v27
    %475 = vmatprep.subr.mxu0 0.0
    %476 = vmatpush2.msra.mxu0 0.0
    %477 = vmatprep.subr.mxu0 0.0
    %478 = vmatpush2.msra.mxu0 0.0
    %479 = vmatprep.subr.mxu0 0.0
    %480 = vmatpush2.msra.mxu0 0.0
    %481 = vmatprep.subr.mxu0 0.0
    %482 = vmatpush2.msra.mxu0 0.0
    %483 = vmatprep.subr.mxu0 0.0
    %484 = vmatpush2.msra.mxu0 0.0
    %485 = vmatprep.subr.mxu0 0.0
    %486 = vmatpush2.msra.mxu0 0.0
    %487 = vmatprep.subr.mxu0 0.0
    %488 = vmatpush2.msra.mxu0 0.0
    %489 = vmatprep.subr.mxu0 0.0
    %490 = vmatpush2.msra.mxu0 0.0
    %491 = vmatprep.subr.mxu0 0.0
    %492 = vmatpush2.msra.mxu0 0.0
    %493 = vmatprep.subr.mxu0 0.0
    %494 = vmatpush2.msra.mxu0 0.0
    %495 = vmatprep.subr.mxu0 0.0
    %496 = vmatpush2.msra.mxu0 0.0
    %497 = vmatprep.subr.mxu0 0.0
    %498 = vmatpush2.msra.mxu0 0.0
    %499 = vmatprep.subr.mxu0 0.0
    %500 = vmatpush2.msra.mxu0 0.0
    %501 = vmatprep.subr.mxu0 0.0
    %502 = vmatpush2.msra.mxu0 0.0
    %503 = vmatprep.subr.mxu0 0.0
    %504 = vmatpush2.msra.mxu0 0.0
    %505 = vmatprep.subr.mxu0 0.0
    %506 = vmatpush2.msra.mxu0 0.0
    %507 = vmatprep.mubr.f32.mxu0 0.0
    %508 = vmatmul.mubr.f32.gmra.mxu0 %v439
    %v509 = vpop.f32.mrf.mxu0
    %v510 = vadd.f32 0.0, %v509
    %v511 = vpop.f32.mrf.mxu0
    %v512 = vadd.f32 0.0, %v511
    %513 = vmatprep.mubr.f32.mxu0 0.0
    %514 = vmatmul.mubr.f32.gmra.mxu0 %v441
    %v515 = vpop.f32.mrf.mxu0
    %v516 = vadd.f32 0.0, %v515
    %v517 = vpop.f32.mrf.mxu0
    %v518 = vadd.f32 0.0, %v517
    %519 = vdwg.mxu0
    %v520 = vadd.f32 %v163, %v510
    %v521 = vadd.f32 %v164, %v516
    %522 = vmatprep.subr.mxu0 0.0
    %523 = vmatpush1.msra.mxu0 0.0
    %524 = vmatprep.subr.mxu0 0.0
    %525 = vmatpush1.msra.mxu0 0.0
    %526 = vmatprep.subr.mxu0 0.0
    %527 = vmatpush1.msra.mxu0 0.0
    %528 = vmatprep.subr.mxu0 0.0
    %529 = vmatpush1.msra.mxu0 0.0
    %530 = vmatprep.subr.mxu0 0.0
    %531 = vmatpush1.msra.mxu0 0.0
    %532 = vmatprep.subr.mxu0 0.0
    %533 = vmatpush1.msra.mxu0 0.0
    %534 = vmatprep.subr.mxu0 0.0
    %535 = vmatpush1.msra.mxu0 0.0
    %536 = vmatprep.subr.mxu0 0.0
    %537 = vmatpush1.msra.mxu0 0.0
    %538 = vmatprep.subr.mxu0 0.0
    %539 = vmatpush1.msra.mxu0 0.0
    %540 = vmatprep.subr.mxu0 0.0
    %541 = vmatpush1.msra.mxu0 0.0
    %542 = vmatprep.subr.mxu0 0.0
    %543 = vmatpush1.msra.mxu0 0.0
    %544 = vmatprep.subr.mxu0 0.0
    %545 = vmatpush1.msra.mxu0 0.0
    %546 = vmatprep.subr.mxu0 0.0
    %547 = vmatpush1.msra.mxu0 0.0
    %548 = vmatprep.subr.mxu0 0.0
    %549 = vmatpush1.msra.mxu0 0.0
    %550 = vmatprep.subr.mxu0 0.0
    %551 = vmatpush1.msra.mxu0 %v518
    %552 = vmatprep.subr.mxu0 0.0
    %553 = vmatpush1.msra.mxu0 %v512
    %554 = vmatprep.subr.mxu0 0.0
    %555 = vmatpush2.msra.mxu0 0.0
    %556 = vmatprep.subr.mxu0 0.0
    %557 = vmatpush2.msra.mxu0 0.0
    %558 = vmatprep.subr.mxu0 0.0
    %559 = vmatpush2.msra.mxu0 0.0
    %560 = vmatprep.subr.mxu0 0.0
    %561 = vmatpush2.msra.mxu0 0.0
    %562 = vmatprep.subr.mxu0 0.0
    %563 = vmatpush2.msra.mxu0 0.0
    %564 = vmatprep.subr.mxu0 0.0
    %565 = vmatpush2.msra.mxu0 0.0
    %566 = vmatprep.subr.mxu0 0.0
    %567 = vmatpush2.msra.mxu0 0.0
    %568 = vmatprep.subr.mxu0 0.0
    %569 = vmatpush2.msra.mxu0 0.0
    %570 = vmatprep.subr.mxu0 0.0
    %571 = vmatpush2.msra.mxu0 0.0
    %572 = vmatprep.subr.mxu0 0.0
    %573 = vmatpush2.msra.mxu0 0.0
    %574 = vmatprep.subr.mxu0 0.0
    %575 = vmatpush2.msra.mxu0 0.0
    %576 = vmatprep.subr.mxu0 0.0
    %577 = vmatpush2.msra.mxu0 0.0
    %578 = vmatprep.subr.mxu0 0.0
    %579 = vmatpush2.msra.mxu0 0.0
    %580 = vmatprep.subr.mxu0 0.0
    %581 = vmatpush2.msra.mxu0 0.0
    %582 = vmatprep.subr.mxu0 0.0
    %583 = vmatpush2.msra.mxu0 0.0
    %584 = vmatprep.subr.mxu0 0.0
    %585 = vmatpush2.msra.mxu0 0.0
    %586 = vmatprep.mubr.f32.mxu0 0.0
    %587 = vmatmul.mubr.f32.gmra.mxu0 %v262
    %v588 = vpop.f32.mrf.mxu0
    %v589 = vadd.f32 0.0, %v588
    %v590 = vpop.f32.mrf.mxu0
    %591 = vmatprep.mubr.f32.mxu0 0.0
    %592 = vmatmul.mubr.f32.gmra.mxu0 %v265
    %v593 = vpop.f32.mrf.mxu0
    %v594 = vadd.f32 0.0, %v593
    %v595 = vpop.f32.mrf.mxu0
    %596 = vdwg.mxu0
    %v597 = vadd.f32 %v520, %v589
    %v598 = vadd.f32 %v521, %v594
    %599 = vrot.lane.b32.xlu0 %v387, 96
    %v600 = vpop.permute.xlu0 %599
    %601 = vrot.lane.b32.xlu0 %v388, 96
    %v602 = vpop.permute.xlu0 %601
    %v605 = vmul.f32 %v348, %v600
    %v606 = vmul.f32 %v348, %v602
    %v607 = vadd.f32 %v597, %v605
    %v608 = vadd.f32 %v598, %v606
    %v609 = vxor.u32 %v607, 2147483648
    %v610 = vxor.u32 %v608, 2147483648
    %v611 = vmul.f32 %v609, 1.442695
    %v612 = vpow.pop %v611
    %v613 = vmul.f32 %v610, 1.442695
    %v614 = vpow.pop %v613
    %v615 = vadd.f32 %v612, 1.0
    %v616 = vadd.f32 %v614, 1.0
    %v617 = vrcp.pop %v615
    %v618 = vmul.f32 1.0, %v617
    %v619 = vrcp.pop %v616
    %v620 = vmul.f32 1.0, %v619
    %v621 = vmul.f32 %v348, %v387
    %v622 = vmul.f32 %v348, %v388
    %v623 = vadd.f32 %v597, %v621
    %v624 = vadd.f32 %v598, %v622
    %v625 = vxor.u32 %v623, 2147483648
    %v626 = vxor.u32 %v624, 2147483648
    %v627 = vmul.f32 %v625, 1.442695
    %v628 = vpow.pop %v627
    %v629 = vmul.f32 %v626, 1.442695
    %v630 = vpow.pop %v629
    %v631 = vadd.f32 %v628, 1.0
    %v632 = vadd.f32 %v630, 1.0
    %v633 = vrcp.pop %v631
    %v634 = vmul.f32 1.0, %v633
    %v635 = vrcp.pop %v632
    %v636 = vmul.f32 1.0, %v635
    %v637 = vtanh.pop %v597
    %v638 = vtanh.pop %v598
    %v639 = vmul.f32 %v634, %v387
    %v640 = vmul.f32 %v636, %v388
    %643 = vrot.lane.b32.xlu0 %v637, 64
    %v644 = vpop.permute.xlu0 %643
    %645 = vrot.lane.b32.xlu0 %v638, 64
    %v646 = vpop.permute.xlu0 %645
    %v649 = vmul.f32 %v618, %v644
    %v650 = vmul.f32 %v620, %v646
    %653 = vrot.lane.b32.xlu0 %v649, 32
    %v654 = vpop.permute.xlu0 %653
    %655 = vrot.lane.b32.xlu0 %v650, 32
    %v656 = vpop.permute.xlu0 %655
    %v659 = vadd.f32 %v639, %v654
    %v660 = vadd.f32 %v640, %v656
    %663 = vrot.lane.b32.xlu0 %v659, 32
    %v664 = vpop.permute.xlu0 %663
    %665 = vrot.lane.b32.xlu0 %v660, 32
    %v666 = vpop.permute.xlu0 %665
    %v669 = vmul.f32 %v348, %v664
    %v670 = vmul.f32 %v348, %v666
    %673 = vrot.lane.b32.xlu0 %v669, 32
    %v674 = vpop.permute.xlu0 %673
    %675 = vrot.lane.b32.xlu0 %v670, 32
    %v676 = vpop.permute.xlu0 %675
    %v679 = vadd.f32 %v597, %v674
    %v680 = vadd.f32 %v598, %v676
    %v681 = vxor.u32 %v679, 2147483648
    %v682 = vxor.u32 %v680, 2147483648
    %v683 = vmul.f32 %v681, 1.442695
    %v684 = vpow.pop %v683
    %v685 = vmul.f32 %v682, 1.442695
    %v686 = vpow.pop %v685
    %v687 = vadd.f32 %v684, 1.0
    %v688 = vadd.f32 %v686, 1.0
    %v689 = vrcp.pop %v687
    %v690 = vmul.f32 1.0, %v689
    %v691 = vrcp.pop %v688
    %v692 = vmul.f32 1.0, %v691
    %v693 = vtanh.pop %v659
    %v694 = vtanh.pop %v660
    %697 = vrot.lane.b32.xlu0 %v693, 64
    %v698 = vpop.permute.xlu0 %697
    %699 = vrot.lane.b32.xlu0 %v694, 64
    %v700 = vpop.permute.xlu0 %699
    %v703 = vmul.f32 %v690, %v698
    %v704 = vmul.f32 %v692, %v700
    %707 = vrot.lane.b32.xlu0 %v703, 32
    %v708 = vpop.permute.xlu0 %707
    %709 = vrot.lane.b32.xlu0 %v704, 32
    %v710 = vpop.permute.xlu0 %709
    %v711 = vsel %vm177, %v708, 0
    %v713 = vsel %vm177, %v710, 0
    %715 = vmatprep.subr.mxu0 0.0
    %716 = vmatpush1.msra.mxu0 0.0
    %717 = vmatprep.subr.mxu0 0.0
    %718 = vmatpush1.msra.mxu0 0.0
    %719 = vmatprep.subr.mxu0 0.0
    %720 = vmatpush1.msra.mxu0 0.0
    %721 = vmatprep.subr.mxu0 0.0
    %722 = vmatpush1.msra.mxu0 0.0
    %723 = vmatprep.subr.mxu0 0.0
    %724 = vmatpush1.msra.mxu0 0.0
    %725 = vmatprep.subr.mxu0 0.0
    %726 = vmatpush1.msra.mxu0 0.0
    %727 = vmatprep.subr.mxu0 0.0
    %728 = vmatpush1.msra.mxu0 0.0
    %729 = vmatprep.subr.mxu0 0.0
    %730 = vmatpush1.msra.mxu0 0.0
    %731 = vmatprep.subr.mxu0 0.0
    %732 = vmatpush1.msra.mxu0 0.0
    %733 = vmatprep.subr.mxu0 0.0
    %734 = vmatpush1.msra.mxu0 0.0
    %735 = vmatprep.subr.mxu0 0.0
    %736 = vmatpush1.msra.mxu0 0.0
    %737 = vmatprep.subr.mxu0 0.0
    %738 = vmatpush1.msra.mxu0 0.0
    %739 = vmatprep.subr.mxu0 %v34
    %740 = vmatpush1.msra.mxu0 %v33
    %741 = vmatprep.subr.mxu0 %v32
    %742 = vmatpush1.msra.mxu0 %v31
    %743 = vmatprep.subr.mxu0 %v30
    %744 = vmatpush1.msra.mxu0 %v29
    %745 = vmatprep.subr.mxu0 %v28
    %746 = vmatpush1.msra.mxu0 %v27
    %747 = vmatprep.subr.mxu0 0.0
    %748 = vmatpush2.msra.mxu0 0.0
    %749 = vmatprep.subr.mxu0 0.0
    %750 = vmatpush2.msra.mxu0 0.0
    %751 = vmatprep.subr.mxu0 0.0
    %752 = vmatpush2.msra.mxu0 0.0
    %753 = vmatprep.subr.mxu0 0.0
    %754 = vmatpush2.msra.mxu0 0.0
    %755 = vmatprep.subr.mxu0 0.0
    %756 = vmatpush2.msra.mxu0 0.0
    %757 = vmatprep.subr.mxu0 0.0
    %758 = vmatpush2.msra.mxu0 0.0
    %759 = vmatprep.subr.mxu0 0.0
    %760 = vmatpush2.msra.mxu0 0.0
    %761 = vmatprep.subr.mxu0 0.0
    %762 = vmatpush2.msra.mxu0 0.0
    %763 = vmatprep.subr.mxu0 0.0
    %764 = vmatpush2.msra.mxu0 0.0
    %765 = vmatprep.subr.mxu0 0.0
    %766 = vmatpush2.msra.mxu0 0.0
    %767 = vmatprep.subr.mxu0 0.0
    %768 = vmatpush2.msra.mxu0 0.0
    %769 = vmatprep.subr.mxu0 0.0
    %770 = vmatpush2.msra.mxu0 0.0
    %771 = vmatprep.subr.mxu0 0.0
    %772 = vmatpush2.msra.mxu0 0.0
    %773 = vmatprep.subr.mxu0 0.0
    %774 = vmatpush2.msra.mxu0 0.0
    %775 = vmatprep.subr.mxu0 0.0
    %776 = vmatpush2.msra.mxu0 0.0
    %777 = vmatprep.subr.mxu0 0.0
    %778 = vmatpush2.msra.mxu0 0.0
    %779 = vmatprep.mubr.f32.mxu0 0.0
    %780 = vmatmul.mubr.f32.gmra.mxu0 %v711
    %v781 = vpop.f32.mrf.mxu0
    %v782 = vadd.f32 0.0, %v781
    %v783 = vpop.f32.mrf.mxu0
    %v784 = vadd.f32 0.0, %v783
    %785 = vmatprep.mubr.f32.mxu0 0.0
    %786 = vmatmul.mubr.f32.gmra.mxu0 %v713
    %v787 = vpop.f32.mrf.mxu0
    %v788 = vadd.f32 0.0, %v787
    %v789 = vpop.f32.mrf.mxu0
    %v790 = vadd.f32 0.0, %v789
    %791 = vdwg.mxu0
    %v792 = vadd.f32 %v165, %v782
    %v793 = vadd.f32 %v166, %v788
    %794 = vmatprep.subr.mxu0 0.0
    %795 = vmatpush1.msra.mxu0 0.0
    %796 = vmatprep.subr.mxu0 0.0
    %797 = vmatpush1.msra.mxu0 0.0
    %798 = vmatprep.subr.mxu0 0.0
    %799 = vmatpush1.msra.mxu0 0.0
    %800 = vmatprep.subr.mxu0 0.0
    %801 = vmatpush1.msra.mxu0 0.0
    %802 = vmatprep.subr.mxu0 0.0
    %803 = vmatpush1.msra.mxu0 0.0
    %804 = vmatprep.subr.mxu0 0.0
    %805 = vmatpush1.msra.mxu0 0.0
    %806 = vmatprep.subr.mxu0 0.0
    %807 = vmatpush1.msra.mxu0 0.0
    %808 = vmatprep.subr.mxu0 0.0
    %809 = vmatpush1.msra.mxu0 0.0
    %810 = vmatprep.subr.mxu0 0.0
    %811 = vmatpush1.msra.mxu0 0.0
    %812 = vmatprep.subr.mxu0 0.0
    %813 = vmatpush1.msra.mxu0 0.0
    %814 = vmatprep.subr.mxu0 0.0
    %815 = vmatpush1.msra.mxu0 0.0
    %816 = vmatprep.subr.mxu0 0.0
    %817 = vmatpush1.msra.mxu0 0.0
    %818 = vmatprep.subr.mxu0 0.0
    %819 = vmatpush1.msra.mxu0 0.0
    %820 = vmatprep.subr.mxu0 0.0
    %821 = vmatpush1.msra.mxu0 0.0
    %822 = vmatprep.subr.mxu0 0.0
    %823 = vmatpush1.msra.mxu0 %v790
    %824 = vmatprep.subr.mxu0 0.0
    %825 = vmatpush1.msra.mxu0 %v784
    %826 = vmatprep.subr.mxu0 0.0
    %827 = vmatpush2.msra.mxu0 0.0
    %828 = vmatprep.subr.mxu0 0.0
    %829 = vmatpush2.msra.mxu0 0.0
    %830 = vmatprep.subr.mxu0 0.0
    %831 = vmatpush2.msra.mxu0 0.0
    %832 = vmatprep.subr.mxu0 0.0
    %833 = vmatpush2.msra.mxu0 0.0
    %834 = vmatprep.subr.mxu0 0.0
    %835 = vmatpush2.msra.mxu0 0.0
    %836 = vmatprep.subr.mxu0 0.0
    %837 = vmatpush2.msra.mxu0 0.0
    %838 = vmatprep.subr.mxu0 0.0
    %839 = vmatpush2.msra.mxu0 0.0
    %840 = vmatprep.subr.mxu0 0.0
    %841 = vmatpush2.msra.mxu0 0.0
    %842 = vmatprep.subr.mxu0 0.0
    %843 = vmatpush2.msra.mxu0 0.0
    %844 = vmatprep.subr.mxu0 0.0
    %845 = vmatpush2.msra.mxu0 0.0
    %846 = vmatprep.subr.mxu0 0.0
    %847 = vmatpush2.msra.mxu0 0.0
    %848 = vmatprep.subr.mxu0 0.0
    %849 = vmatpush2.msra.mxu0 0.0
    %850 = vmatprep.subr.mxu0 0.0
    %851 = vmatpush2.msra.mxu0 0.0
    %852 = vmatprep.subr.mxu0 0.0
    %853 = vmatpush2.msra.mxu0 0.0
    %854 = vmatprep.subr.mxu0 0.0
    %855 = vmatpush2.msra.mxu0 0.0
    %856 = vmatprep.subr.mxu0 0.0
    %857 = vmatpush2.msra.mxu0 0.0
    %858 = vmatprep.mubr.f32.mxu0 0.0
    %859 = vmatmul.mubr.f32.gmra.mxu0 %v262
    %v860 = vpop.f32.mrf.mxu0
    %v861 = vadd.f32 0.0, %v860
    %v862 = vpop.f32.mrf.mxu0
    %863 = vmatprep.mubr.f32.mxu0 0.0
    %864 = vmatmul.mubr.f32.gmra.mxu0 %v265
    %v865 = vpop.f32.mrf.mxu0
    %v866 = vadd.f32 0.0, %v865
    %v867 = vpop.f32.mrf.mxu0
    %868 = vdwg.mxu0
    %v869 = vadd.f32 %v792, %v861
    %v870 = vadd.f32 %v793, %v866
    %871 = vrot.lane.b32.xlu0 %v659, 96
    %v872 = vpop.permute.xlu0 %871
    %873 = vrot.lane.b32.xlu0 %v660, 96
    %v874 = vpop.permute.xlu0 %873
    %v877 = vmul.f32 %v348, %v872
    %v878 = vmul.f32 %v348, %v874
    %v879 = vadd.f32 %v869, %v877
    %v880 = vadd.f32 %v870, %v878
    %v881 = vxor.u32 %v879, 2147483648
    %v882 = vxor.u32 %v880, 2147483648
    %v883 = vmul.f32 %v881, 1.442695
    %v884 = vpow.pop %v883
    %v885 = vmul.f32 %v882, 1.442695
    %v886 = vpow.pop %v885
    %v887 = vadd.f32 %v884, 1.0
    %v888 = vadd.f32 %v886, 1.0
    %v889 = vrcp.pop %v887
    %v890 = vmul.f32 1.0, %v889
    %v891 = vrcp.pop %v888
    %v892 = vmul.f32 1.0, %v891
    %v893 = vmul.f32 %v348, %v659
    %v894 = vmul.f32 %v348, %v660
    %v895 = vadd.f32 %v869, %v893
    %v896 = vadd.f32 %v870, %v894
    %v897 = vxor.u32 %v895, 2147483648
    %v898 = vxor.u32 %v896, 2147483648
    %v899 = vmul.f32 %v897, 1.442695
    %v900 = vpow.pop %v899
    %v901 = vmul.f32 %v898, 1.442695
    %v902 = vpow.pop %v901
    %v903 = vadd.f32 %v900, 1.0
    %v904 = vadd.f32 %v902, 1.0
    %v905 = vrcp.pop %v903
    %v906 = vmul.f32 1.0, %v905
    %v907 = vrcp.pop %v904
    %v908 = vmul.f32 1.0, %v907
    %v909 = vtanh.pop %v869
    %v910 = vtanh.pop %v870
    %v911 = vmul.f32 %v906, %v659
    %v912 = vmul.f32 %v908, %v660
    %915 = vrot.lane.b32.xlu0 %v909, 64
    %v916 = vpop.permute.xlu0 %915
    %917 = vrot.lane.b32.xlu0 %v910, 64
    %v918 = vpop.permute.xlu0 %917
    %v921 = vmul.f32 %v890, %v916
    %v922 = vmul.f32 %v892, %v918
    %925 = vrot.lane.b32.xlu0 %v921, 32
    %v926 = vpop.permute.xlu0 %925
    %927 = vrot.lane.b32.xlu0 %v922, 32
    %v928 = vpop.permute.xlu0 %927
    %v931 = vadd.f32 %v911, %v926
    %v932 = vadd.f32 %v912, %v928
    %935 = vrot.lane.b32.xlu0 %v931, 32
    %v936 = vpop.permute.xlu0 %935
    %937 = vrot.lane.b32.xlu0 %v932, 32
    %v938 = vpop.permute.xlu0 %937
    %v941 = vmul.f32 %v348, %v936
    %v942 = vmul.f32 %v348, %v938
    %945 = vrot.lane.b32.xlu0 %v941, 32
    %v946 = vpop.permute.xlu0 %945
    %947 = vrot.lane.b32.xlu0 %v942, 32
    %v948 = vpop.permute.xlu0 %947
    %v951 = vadd.f32 %v869, %v946
    %v952 = vadd.f32 %v870, %v948
    %v953 = vxor.u32 %v951, 2147483648
    %v954 = vxor.u32 %v952, 2147483648
    %v955 = vmul.f32 %v953, 1.442695
    %v956 = vpow.pop %v955
    %v957 = vmul.f32 %v954, 1.442695
    %v958 = vpow.pop %v957
    %v959 = vadd.f32 %v956, 1.0
    %v960 = vadd.f32 %v958, 1.0
    %v961 = vrcp.pop %v959
    %v962 = vmul.f32 1.0, %v961
    %v963 = vrcp.pop %v960
    %v964 = vmul.f32 1.0, %v963
    %v965 = vtanh.pop %v931
    %v966 = vtanh.pop %v932
    %969 = vrot.lane.b32.xlu0 %v965, 64
    %v970 = vpop.permute.xlu0 %969
    %971 = vrot.lane.b32.xlu0 %v966, 64
    %v972 = vpop.permute.xlu0 %971
    %v975 = vmul.f32 %v962, %v970
    %v976 = vmul.f32 %v964, %v972
    %979 = vrot.lane.b32.xlu0 %v975, 32
    %v980 = vpop.permute.xlu0 %979
    %981 = vrot.lane.b32.xlu0 %v976, 32
    %v982 = vpop.permute.xlu0 %981
    %v983 = vsel %vm177, %v980, 0
    %v985 = vsel %vm177, %v982, 0
    %987 = vmatprep.subr.mxu0 0.0
    %988 = vmatpush1.msra.mxu0 0.0
    %989 = vmatprep.subr.mxu0 0.0
    %990 = vmatpush1.msra.mxu0 0.0
    %991 = vmatprep.subr.mxu0 0.0
    %992 = vmatpush1.msra.mxu0 0.0
    %993 = vmatprep.subr.mxu0 0.0
    %994 = vmatpush1.msra.mxu0 0.0
    %995 = vmatprep.subr.mxu0 0.0
    %996 = vmatpush1.msra.mxu0 0.0
    %997 = vmatprep.subr.mxu0 0.0
    %998 = vmatpush1.msra.mxu0 0.0
    %999 = vmatprep.subr.mxu0 0.0
    %1000 = vmatpush1.msra.mxu0 0.0
    %1001 = vmatprep.subr.mxu0 0.0
    %1002 = vmatpush1.msra.mxu0 0.0
    %1003 = vmatprep.subr.mxu0 0.0
    %1004 = vmatpush1.msra.mxu0 0.0
    %1005 = vmatprep.subr.mxu0 0.0
    %1006 = vmatpush1.msra.mxu0 0.0
    %1007 = vmatprep.subr.mxu0 0.0
    %1008 = vmatpush1.msra.mxu0 0.0
    %1009 = vmatprep.subr.mxu0 0.0
    %1010 = vmatpush1.msra.mxu0 0.0
    %1011 = vmatprep.subr.mxu0 %v34
    %1012 = vmatpush1.msra.mxu0 %v33
    %1013 = vmatprep.subr.mxu0 %v32
    %1014 = vmatpush1.msra.mxu0 %v31
    %1015 = vmatprep.subr.mxu0 %v30
    %1016 = vmatpush1.msra.mxu0 %v29
    %1017 = vmatprep.subr.mxu0 %v28
    %1018 = vmatpush1.msra.mxu0 %v27
    %1019 = vmatprep.subr.mxu0 0.0
    %1020 = vmatpush2.msra.mxu0 0.0
    %1021 = vmatprep.subr.mxu0 0.0
    %1022 = vmatpush2.msra.mxu0 0.0
    %1023 = vmatprep.subr.mxu0 0.0
    %1024 = vmatpush2.msra.mxu0 0.0
    %1025 = vmatprep.subr.mxu0 0.0
    %1026 = vmatpush2.msra.mxu0 0.0
    %1027 = vmatprep.subr.mxu0 0.0
    %1028 = vmatpush2.msra.mxu0 0.0
    %1029 = vmatprep.subr.mxu0 0.0
    %1030 = vmatpush2.msra.mxu0 0.0
    %1031 = vmatprep.subr.mxu0 0.0
    %1032 = vmatpush2.msra.mxu0 0.0
    %1033 = vmatprep.subr.mxu0 0.0
    %1034 = vmatpush2.msra.mxu0 0.0
    %1035 = vmatprep.subr.mxu0 0.0
    %1036 = vmatpush2.msra.mxu0 0.0
    %1037 = vmatprep.subr.mxu0 0.0
    %1038 = vmatpush2.msra.mxu0 0.0
    %1039 = vmatprep.subr.mxu0 0.0
    %1040 = vmatpush2.msra.mxu0 0.0
    %1041 = vmatprep.subr.mxu0 0.0
    %1042 = vmatpush2.msra.mxu0 0.0
    %1043 = vmatprep.subr.mxu0 0.0
    %1044 = vmatpush2.msra.mxu0 0.0
    %1045 = vmatprep.subr.mxu0 0.0
    %1046 = vmatpush2.msra.mxu0 0.0
    %1047 = vmatprep.subr.mxu0 0.0
    %1048 = vmatpush2.msra.mxu0 0.0
    %1049 = vmatprep.subr.mxu0 0.0
    %1050 = vmatpush2.msra.mxu0 0.0
    %1051 = vmatprep.mubr.f32.mxu0 0.0
    %1052 = vmatmul.mubr.f32.gmra.mxu0 %v983
    %v1053 = vpop.f32.mrf.mxu0
    %v1054 = vadd.f32 0.0, %v1053
    %v1055 = vpop.f32.mrf.mxu0
    %v1056 = vadd.f32 0.0, %v1055
    %1057 = vmatprep.mubr.f32.mxu0 0.0
    %1058 = vmatmul.mubr.f32.gmra.mxu0 %v985
    %v1059 = vpop.f32.mrf.mxu0
    %v1060 = vadd.f32 0.0, %v1059
    %v1061 = vpop.f32.mrf.mxu0
    %v1062 = vadd.f32 0.0, %v1061
    %1063 = vdwg.mxu0
    %v1064 = vadd.f32 %v167, %v1054
    %v1065 = vadd.f32 %v168, %v1060
    %1066 = vmatprep.subr.mxu0 0.0
    %1067 = vmatpush1.msra.mxu0 0.0
    %1068 = vmatprep.subr.mxu0 0.0
    %1069 = vmatpush1.msra.mxu0 0.0
    %1070 = vmatprep.subr.mxu0 0.0
    %1071 = vmatpush1.msra.mxu0 0.0
    %1072 = vmatprep.subr.mxu0 0.0
    %1073 = vmatpush1.msra.mxu0 0.0
    %1074 = vmatprep.subr.mxu0 0.0
    %1075 = vmatpush1.msra.mxu0 0.0
    %1076 = vmatprep.subr.mxu0 0.0
    %1077 = vmatpush1.msra.mxu0 0.0
    %1078 = vmatprep.subr.mxu0 0.0
    %1079 = vmatpush1.msra.mxu0 0.0
    %1080 = vmatprep.subr.mxu0 0.0
    %1081 = vmatpush1.msra.mxu0 0.0
    %1082 = vmatprep.subr.mxu0 0.0
    %1083 = vmatpush1.msra.mxu0 0.0
    %1084 = vmatprep.subr.mxu0 0.0
    %1085 = vmatpush1.msra.mxu0 0.0
    %1086 = vmatprep.subr.mxu0 0.0
    %1087 = vmatpush1.msra.mxu0 0.0
    %1088 = vmatprep.subr.mxu0 0.0
    %1089 = vmatpush1.msra.mxu0 0.0
    %1090 = vmatprep.subr.mxu0 0.0
    %1091 = vmatpush1.msra.mxu0 0.0
    %1092 = vmatprep.subr.mxu0 0.0
    %1093 = vmatpush1.msra.mxu0 0.0
    %1094 = vmatprep.subr.mxu0 0.0
    %1095 = vmatpush1.msra.mxu0 %v1062
    %1096 = vmatprep.subr.mxu0 0.0
    %1097 = vmatpush1.msra.mxu0 %v1056
    %1098 = vmatprep.subr.mxu0 0.0
    %1099 = vmatpush2.msra.mxu0 0.0
    %1100 = vmatprep.subr.mxu0 0.0
    %1101 = vmatpush2.msra.mxu0 0.0
    %1102 = vmatprep.subr.mxu0 0.0
    %1103 = vmatpush2.msra.mxu0 0.0
    %1104 = vmatprep.subr.mxu0 0.0
    %1105 = vmatpush2.msra.mxu0 0.0
    %1106 = vmatprep.subr.mxu0 0.0
    %1107 = vmatpush2.msra.mxu0 0.0
    %1108 = vmatprep.subr.mxu0 0.0
    %1109 = vmatpush2.msra.mxu0 0.0
    %1110 = vmatprep.subr.mxu0 0.0
    %1111 = vmatpush2.msra.mxu0 0.0
    %1112 = vmatprep.subr.mxu0 0.0
    %1113 = vmatpush2.msra.mxu0 0.0
    %1114 = vmatprep.subr.mxu0 0.0
    %1115 = vmatpush2.msra.mxu0 0.0
    %1116 = vmatprep.subr.mxu0 0.0
    %1117 = vmatpush2.msra.mxu0 0.0
    %1118 = vmatprep.subr.mxu0 0.0
    %1119 = vmatpush2.msra.mxu0 0.0
    %1120 = vmatprep.subr.mxu0 0.0
    %1121 = vmatpush2.msra.mxu0 0.0
    %1122 = vmatprep.subr.mxu0 0.0
    %1123 = vmatpush2.msra.mxu0 0.0
    %1124 = vmatprep.subr.mxu0 0.0
    %1125 = vmatpush2.msra.mxu0 0.0
    %1126 = vmatprep.subr.mxu0 0.0
    %1127 = vmatpush2.msra.mxu0 0.0
    %1128 = vmatprep.subr.mxu0 0.0
    %1129 = vmatpush2.msra.mxu0 0.0
    %1130 = vmatprep.mubr.f32.mxu0 0.0
    %1131 = vmatmul.mubr.f32.gmra.mxu0 %v262
    %v1132 = vpop.f32.mrf.mxu0
    %v1133 = vadd.f32 0.0, %v1132
    %v1134 = vpop.f32.mrf.mxu0
    %1135 = vmatprep.mubr.f32.mxu0 0.0
    %1136 = vmatmul.mubr.f32.gmra.mxu0 %v265
    %v1137 = vpop.f32.mrf.mxu0
    %v1138 = vadd.f32 0.0, %v1137
    %v1139 = vpop.f32.mrf.mxu0
    %1140 = vdwg.mxu0
    %v1141 = vadd.f32 %v1064, %v1133
    %v1142 = vadd.f32 %v1065, %v1138
    %1143 = vrot.lane.b32.xlu0 %v931, 96
    %v1144 = vpop.permute.xlu0 %1143
    %1145 = vrot.lane.b32.xlu0 %v932, 96
    %v1146 = vpop.permute.xlu0 %1145
    %v1149 = vmul.f32 %v348, %v1144
    %v1150 = vmul.f32 %v348, %v1146
    %v1151 = vadd.f32 %v1141, %v1149
    %v1152 = vadd.f32 %v1142, %v1150
    %v1153 = vxor.u32 %v1151, 2147483648
    %v1154 = vxor.u32 %v1152, 2147483648
    %v1155 = vmul.f32 %v1153, 1.442695
    %v1156 = vpow.pop %v1155
    %v1157 = vmul.f32 %v1154, 1.442695
    %v1158 = vpow.pop %v1157
    %v1159 = vadd.f32 %v1156, 1.0
    %v1160 = vadd.f32 %v1158, 1.0
    %v1161 = vrcp.pop %v1159
    %v1162 = vmul.f32 1.0, %v1161
    %v1163 = vrcp.pop %v1160
    %v1164 = vmul.f32 1.0, %v1163
    %v1165 = vmul.f32 %v348, %v931
    %v1166 = vmul.f32 %v348, %v932
    %v1167 = vadd.f32 %v1141, %v1165
    %v1168 = vadd.f32 %v1142, %v1166
    %v1169 = vxor.u32 %v1167, 2147483648
    %v1170 = vxor.u32 %v1168, 2147483648
    %v1171 = vmul.f32 %v1169, 1.442695
    %v1172 = vpow.pop %v1171
    %v1173 = vmul.f32 %v1170, 1.442695
    %v1174 = vpow.pop %v1173
    %v1175 = vadd.f32 %v1172, 1.0
    %v1176 = vadd.f32 %v1174, 1.0
    %v1177 = vrcp.pop %v1175
    %v1178 = vmul.f32 1.0, %v1177
    %v1179 = vrcp.pop %v1176
    %v1180 = vmul.f32 1.0, %v1179
    %v1181 = vtanh.pop %v1141
    %v1182 = vtanh.pop %v1142
    %v1183 = vmul.f32 %v1178, %v931
    %v1184 = vmul.f32 %v1180, %v932
    %1187 = vrot.lane.b32.xlu0 %v1181, 64
    %v1188 = vpop.permute.xlu0 %1187
    %1189 = vrot.lane.b32.xlu0 %v1182, 64
    %v1190 = vpop.permute.xlu0 %1189
    %v1193 = vmul.f32 %v1162, %v1188
    %v1194 = vmul.f32 %v1164, %v1190
    %1197 = vrot.lane.b32.xlu0 %v1193, 32
    %v1198 = vpop.permute.xlu0 %1197
    %1199 = vrot.lane.b32.xlu0 %v1194, 32
    %v1200 = vpop.permute.xlu0 %1199
    %v1203 = vadd.f32 %v1183, %v1198
    %v1204 = vadd.f32 %v1184, %v1200
    %1207 = vrot.lane.b32.xlu0 %v1203, 32
    %v1208 = vpop.permute.xlu0 %1207
    %1209 = vrot.lane.b32.xlu0 %v1204, 32
    %v1210 = vpop.permute.xlu0 %1209
    %v1213 = vmul.f32 %v348, %v1208
    %v1214 = vmul.f32 %v348, %v1210
    %1217 = vrot.lane.b32.xlu0 %v1213, 32
    %v1218 = vpop.permute.xlu0 %1217
    %1219 = vrot.lane.b32.xlu0 %v1214, 32
    %v1220 = vpop.permute.xlu0 %1219
    %v1223 = vadd.f32 %v1141, %v1218
    %v1224 = vadd.f32 %v1142, %v1220
    %v1225 = vxor.u32 %v1223, 2147483648
    %v1226 = vxor.u32 %v1224, 2147483648
    %v1227 = vmul.f32 %v1225, 1.442695
    %v1228 = vpow.pop %v1227
    %v1229 = vmul.f32 %v1226, 1.442695
    %v1230 = vpow.pop %v1229
    %v1231 = vadd.f32 %v1228, 1.0
    %v1232 = vadd.f32 %v1230, 1.0
    %v1233 = vrcp.pop %v1231
    %v1234 = vmul.f32 1.0, %v1233
    %v1235 = vrcp.pop %v1232
    %v1236 = vmul.f32 1.0, %v1235
    %v1237 = vtanh.pop %v1203
    %v1238 = vtanh.pop %v1204
    %1241 = vrot.lane.b32.xlu0 %v1237, 64
    %v1242 = vpop.permute.xlu0 %1241
    %1243 = vrot.lane.b32.xlu0 %v1238, 64
    %v1244 = vpop.permute.xlu0 %1243
    %v1247 = vmul.f32 %v1234, %v1242
    %v1248 = vmul.f32 %v1236, %v1244
    %1251 = vrot.lane.b32.xlu0 %v1247, 32
    %v1252 = vpop.permute.xlu0 %1251
    %1253 = vrot.lane.b32.xlu0 %v1248, 32
    %v1254 = vpop.permute.xlu0 %1253
    %v1255 = vsel %vm177, %v1252, 0
    %v1257 = vsel %vm177, %v1254, 0
    %1259 = vmatprep.subr.mxu0 0.0
    %1260 = vmatpush1.msra.mxu0 0.0
    %1261 = vmatprep.subr.mxu0 0.0
    %1262 = vmatpush1.msra.mxu0 0.0
    %1263 = vmatprep.subr.mxu0 0.0
    %1264 = vmatpush1.msra.mxu0 0.0
    %1265 = vmatprep.subr.mxu0 0.0
    %1266 = vmatpush1.msra.mxu0 0.0
    %1267 = vmatprep.subr.mxu0 0.0
    %1268 = vmatpush1.msra.mxu0 0.0
    %1269 = vmatprep.subr.mxu0 0.0
    %1270 = vmatpush1.msra.mxu0 0.0
    %1271 = vmatprep.subr.mxu0 0.0
    %1272 = vmatpush1.msra.mxu0 0.0
    %1273 = vmatprep.subr.mxu0 0.0
    %1274 = vmatpush1.msra.mxu0 0.0
    %1275 = vmatprep.subr.mxu0 0.0
    %1276 = vmatpush1.msra.mxu0 0.0
    %1277 = vmatprep.subr.mxu0 0.0
    %1278 = vmatpush1.msra.mxu0 0.0
    %1279 = vmatprep.subr.mxu0 0.0
    %1280 = vmatpush1.msra.mxu0 0.0
    %1281 = vmatprep.subr.mxu0 0.0
    %1282 = vmatpush1.msra.mxu0 0.0
    %1283 = vmatprep.subr.mxu0 %v34
    %1284 = vmatpush1.msra.mxu0 %v33
    %1285 = vmatprep.subr.mxu0 %v32
    %1286 = vmatpush1.msra.mxu0 %v31
    %1287 = vmatprep.subr.mxu0 %v30
    %1288 = vmatpush1.msra.mxu0 %v29
    %1289 = vmatprep.subr.mxu0 %v28
    %1290 = vmatpush1.msra.mxu0 %v27
    %1291 = vmatprep.subr.mxu0 0.0
    %1292 = vmatpush2.msra.mxu0 0.0
    %1293 = vmatprep.subr.mxu0 0.0
    %1294 = vmatpush2.msra.mxu0 0.0
    %1295 = vmatprep.subr.mxu0 0.0
    %1296 = vmatpush2.msra.mxu0 0.0
    %1297 = vmatprep.subr.mxu0 0.0
    %1298 = vmatpush2.msra.mxu0 0.0
    %1299 = vmatprep.subr.mxu0 0.0
    %1300 = vmatpush2.msra.mxu0 0.0
    %1301 = vmatprep.subr.mxu0 0.0
    %1302 = vmatpush2.msra.mxu0 0.0
    %1303 = vmatprep.subr.mxu0 0.0
    %1304 = vmatpush2.msra.mxu0 0.0
    %1305 = vmatprep.subr.mxu0 0.0
    %1306 = vmatpush2.msra.mxu0 0.0
    %1307 = vmatprep.subr.mxu0 0.0
    %1308 = vmatpush2.msra.mxu0 0.0
    %1309 = vmatprep.subr.mxu0 0.0
    %1310 = vmatpush2.msra.mxu0 0.0
    %1311 = vmatprep.subr.mxu0 0.0
    %1312 = vmatpush2.msra.mxu0 0.0
    %1313 = vmatprep.subr.mxu0 0.0
    %1314 = vmatpush2.msra.mxu0 0.0
    %1315 = vmatprep.subr.mxu0 0.0
    %1316 = vmatpush2.msra.mxu0 0.0
    %1317 = vmatprep.subr.mxu0 0.0
    %1318 = vmatpush2.msra.mxu0 0.0
    %1319 = vmatprep.subr.mxu0 0.0
    %1320 = vmatpush2.msra.mxu0 0.0
    %1321 = vmatprep.subr.mxu0 0.0
    %1322 = vmatpush2.msra.mxu0 0.0
    %1323 = vmatprep.mubr.f32.mxu0 0.0
    %1324 = vmatmul.mubr.f32.gmra.mxu0 %v1255
    %v1325 = vpop.f32.mrf.mxu0
    %v1326 = vadd.f32 0.0, %v1325
    %v1327 = vpop.f32.mrf.mxu0
    %v1328 = vadd.f32 0.0, %v1327
    %1329 = vmatprep.mubr.f32.mxu0 0.0
    %1330 = vmatmul.mubr.f32.gmra.mxu0 %v1257
    %v1331 = vpop.f32.mrf.mxu0
    %v1332 = vadd.f32 0.0, %v1331
    %v1333 = vpop.f32.mrf.mxu0
    %v1334 = vadd.f32 0.0, %v1333
    %1335 = vdwg.mxu0
    %v1336 = vadd.f32 %v169, %v1326
    %v1337 = vadd.f32 %v170, %v1332
    %1338 = vmatprep.subr.mxu0 0.0
    %1339 = vmatpush1.msra.mxu0 0.0
    %1340 = vmatprep.subr.mxu0 0.0
    %1341 = vmatpush1.msra.mxu0 0.0
    %1342 = vmatprep.subr.mxu0 0.0
    %1343 = vmatpush1.msra.mxu0 0.0
    %1344 = vmatprep.subr.mxu0 0.0
    %1345 = vmatpush1.msra.mxu0 0.0
    %1346 = vmatprep.subr.mxu0 0.0
    %1347 = vmatpush1.msra.mxu0 0.0
    %1348 = vmatprep.subr.mxu0 0.0
    %1349 = vmatpush1.msra.mxu0 0.0
    %1350 = vmatprep.subr.mxu0 0.0
    %1351 = vmatpush1.msra.mxu0 0.0
    %1352 = vmatprep.subr.mxu0 0.0
    %1353 = vmatpush1.msra.mxu0 0.0
    %1354 = vmatprep.subr.mxu0 0.0
    %1355 = vmatpush1.msra.mxu0 0.0
    %1356 = vmatprep.subr.mxu0 0.0
    %1357 = vmatpush1.msra.mxu0 0.0
    %1358 = vmatprep.subr.mxu0 0.0
    %1359 = vmatpush1.msra.mxu0 0.0
    %1360 = vmatprep.subr.mxu0 0.0
    %1361 = vmatpush1.msra.mxu0 0.0
    %1362 = vmatprep.subr.mxu0 0.0
    %1363 = vmatpush1.msra.mxu0 0.0
    %1364 = vmatprep.subr.mxu0 0.0
    %1365 = vmatpush1.msra.mxu0 0.0
    %1366 = vmatprep.subr.mxu0 0.0
    %1367 = vmatpush1.msra.mxu0 %v1334
    %1368 = vmatprep.subr.mxu0 0.0
    %1369 = vmatpush1.msra.mxu0 %v1328
    %1370 = vmatprep.subr.mxu0 0.0
    %1371 = vmatpush2.msra.mxu0 0.0
    %1372 = vmatprep.subr.mxu0 0.0
    %1373 = vmatpush2.msra.mxu0 0.0
    %1374 = vmatprep.subr.mxu0 0.0
    %1375 = vmatpush2.msra.mxu0 0.0
    %1376 = vmatprep.subr.mxu0 0.0
    %1377 = vmatpush2.msra.mxu0 0.0
    %1378 = vmatprep.subr.mxu0 0.0
    %1379 = vmatpush2.msra.mxu0 0.0
    %1380 = vmatprep.subr.mxu0 0.0
    %1381 = vmatpush2.msra.mxu0 0.0
    %1382 = vmatprep.subr.mxu0 0.0
    %1383 = vmatpush2.msra.mxu0 0.0
    %1384 = vmatprep.subr.mxu0 0.0
    %1385 = vmatpush2.msra.mxu0 0.0
    %1386 = vmatprep.subr.mxu0 0.0
    %1387 = vmatpush2.msra.mxu0 0.0
    %1388 = vmatprep.subr.mxu0 0.0
    %1389 = vmatpush2.msra.mxu0 0.0
    %1390 = vmatprep.subr.mxu0 0.0
    %1391 = vmatpush2.msra.mxu0 0.0
    %1392 = vmatprep.subr.mxu0 0.0
    %1393 = vmatpush2.msra.mxu0 0.0
    %1394 = vmatprep.subr.mxu0 0.0
    %1395 = vmatpush2.msra.mxu0 0.0
    %1396 = vmatprep.subr.mxu0 0.0
    %1397 = vmatpush2.msra.mxu0 0.0
    %1398 = vmatprep.subr.mxu0 0.0
    %1399 = vmatpush2.msra.mxu0 0.0
    %1400 = vmatprep.subr.mxu0 0.0
    %1401 = vmatpush2.msra.mxu0 0.0
    %1402 = vmatprep.mubr.f32.mxu0 0.0
    %1403 = vmatmul.mubr.f32.gmra.mxu0 %v262
    %v1404 = vpop.f32.mrf.mxu0
    %v1405 = vadd.f32 0.0, %v1404
    %v1406 = vpop.f32.mrf.mxu0
    %1407 = vmatprep.mubr.f32.mxu0 0.0
    %1408 = vmatmul.mubr.f32.gmra.mxu0 %v265
    %v1409 = vpop.f32.mrf.mxu0
    %v1410 = vadd.f32 0.0, %v1409
    %v1411 = vpop.f32.mrf.mxu0
    %1412 = vdwg.mxu0
    %v1413 = vadd.f32 %v1336, %v1405
    %v1414 = vadd.f32 %v1337, %v1410
    %1415 = vrot.lane.b32.xlu0 %v1203, 96
    %v1416 = vpop.permute.xlu0 %1415
    %1417 = vrot.lane.b32.xlu0 %v1204, 96
    %v1418 = vpop.permute.xlu0 %1417
    %v1421 = vmul.f32 %v348, %v1416
    %v1422 = vmul.f32 %v348, %v1418
    %v1423 = vadd.f32 %v1413, %v1421
    %v1424 = vadd.f32 %v1414, %v1422
    %v1425 = vxor.u32 %v1423, 2147483648
    %v1426 = vxor.u32 %v1424, 2147483648
    %v1427 = vmul.f32 %v1425, 1.442695
    %v1428 = vpow.pop %v1427
    %v1429 = vmul.f32 %v1426, 1.442695
    %v1430 = vpow.pop %v1429
    %v1431 = vadd.f32 %v1428, 1.0
    %v1432 = vadd.f32 %v1430, 1.0
    %v1433 = vrcp.pop %v1431
    %v1434 = vmul.f32 1.0, %v1433
    %v1435 = vrcp.pop %v1432
    %v1436 = vmul.f32 1.0, %v1435
    %v1437 = vmul.f32 %v348, %v1203
    %v1438 = vmul.f32 %v348, %v1204
    %v1439 = vadd.f32 %v1413, %v1437
    %v1440 = vadd.f32 %v1414, %v1438
    %v1441 = vxor.u32 %v1439, 2147483648
    %v1442 = vxor.u32 %v1440, 2147483648
    %v1443 = vmul.f32 %v1441, 1.442695
    %v1444 = vpow.pop %v1443
    %v1445 = vmul.f32 %v1442, 1.442695
    %v1446 = vpow.pop %v1445
    %v1447 = vadd.f32 %v1444, 1.0
    %v1448 = vadd.f32 %v1446, 1.0
    %v1449 = vrcp.pop %v1447
    %v1450 = vmul.f32 1.0, %v1449
    %v1451 = vrcp.pop %v1448
    %v1452 = vmul.f32 1.0, %v1451
    %v1453 = vtanh.pop %v1413
    %v1454 = vtanh.pop %v1414
    %v1455 = vmul.f32 %v1450, %v1203
    %v1456 = vmul.f32 %v1452, %v1204
    %1459 = vrot.lane.b32.xlu0 %v1453, 64
    %v1460 = vpop.permute.xlu0 %1459
    %1461 = vrot.lane.b32.xlu0 %v1454, 64
    %v1462 = vpop.permute.xlu0 %1461
    %v1465 = vmul.f32 %v1434, %v1460
    %v1466 = vmul.f32 %v1436, %v1462
    %1469 = vrot.lane.b32.xlu0 %v1465, 32
    %v1470 = vpop.permute.xlu0 %1469
    %1471 = vrot.lane.b32.xlu0 %v1466, 32
    %v1472 = vpop.permute.xlu0 %1471
    %v1475 = vadd.f32 %v1455, %v1470
    %v1476 = vadd.f32 %v1456, %v1472
    %1479 = vrot.lane.b32.xlu0 %v1475, 32
    %v1480 = vpop.permute.xlu0 %1479
    %1481 = vrot.lane.b32.xlu0 %v1476, 32
    %v1482 = vpop.permute.xlu0 %1481
    %v1485 = vmul.f32 %v348, %v1480
    %v1486 = vmul.f32 %v348, %v1482
    %1489 = vrot.lane.b32.xlu0 %v1485, 32
    %v1490 = vpop.permute.xlu0 %1489
    %1491 = vrot.lane.b32.xlu0 %v1486, 32
    %v1492 = vpop.permute.xlu0 %1491
    %v1495 = vadd.f32 %v1413, %v1490
    %v1496 = vadd.f32 %v1414, %v1492
    %v1497 = vxor.u32 %v1495, 2147483648
    %v1498 = vxor.u32 %v1496, 2147483648
    %v1499 = vmul.f32 %v1497, 1.442695
    %v1500 = vpow.pop %v1499
    %v1501 = vmul.f32 %v1498, 1.442695
    %v1502 = vpow.pop %v1501
    %v1503 = vadd.f32 %v1500, 1.0
    %v1504 = vadd.f32 %v1502, 1.0
    %v1505 = vrcp.pop %v1503
    %v1506 = vmul.f32 1.0, %v1505
    %v1507 = vrcp.pop %v1504
    %v1508 = vmul.f32 1.0, %v1507
    %v1509 = vtanh.pop %v1475
    %v1510 = vtanh.pop %v1476
    %1513 = vrot.lane.b32.xlu0 %v1509, 64
    %v1514 = vpop.permute.xlu0 %1513
    %1515 = vrot.lane.b32.xlu0 %v1510, 64
    %v1516 = vpop.permute.xlu0 %1515
    %v1519 = vmul.f32 %v1506, %v1514
    %v1520 = vmul.f32 %v1508, %v1516
    %1523 = vrot.lane.b32.xlu0 %v1519, 32
    %v1524 = vpop.permute.xlu0 %1523
    %1525 = vrot.lane.b32.xlu0 %v1520, 32
    %v1526 = vpop.permute.xlu0 %1525
    %v1527 = vsel %vm177, %v1524, 0
    %v1529 = vsel %vm177, %v1526, 0
    %1531 = vmatprep.subr.mxu0 0.0
    %1532 = vmatpush1.msra.mxu0 0.0
    %1533 = vmatprep.subr.mxu0 0.0
    %1534 = vmatpush1.msra.mxu0 0.0
    %1535 = vmatprep.subr.mxu0 0.0
    %1536 = vmatpush1.msra.mxu0 0.0
    %1537 = vmatprep.subr.mxu0 0.0
    %1538 = vmatpush1.msra.mxu0 0.0
    %1539 = vmatprep.subr.mxu0 0.0
    %1540 = vmatpush1.msra.mxu0 0.0
    %1541 = vmatprep.subr.mxu0 0.0
    %1542 = vmatpush1.msra.mxu0 0.0
    %1543 = vmatprep.subr.mxu0 0.0
    %1544 = vmatpush1.msra.mxu0 0.0
    %1545 = vmatprep.subr.mxu0 0.0
    %1546 = vmatpush1.msra.mxu0 0.0
    %1547 = vmatprep.subr.mxu0 0.0
    %1548 = vmatpush1.msra.mxu0 0.0
    %1549 = vmatprep.subr.mxu0 0.0
    %1550 = vmatpush1.msra.mxu0 0.0
    %1551 = vmatprep.subr.mxu0 0.0
    %1552 = vmatpush1.msra.mxu0 0.0
    %1553 = vmatprep.subr.mxu0 0.0
    %1554 = vmatpush1.msra.mxu0 0.0
    %1555 = vmatprep.subr.mxu0 %v34
    %1556 = vmatpush1.msra.mxu0 %v33
    %1557 = vmatprep.subr.mxu0 %v32
    %1558 = vmatpush1.msra.mxu0 %v31
    %1559 = vmatprep.subr.mxu0 %v30
    %1560 = vmatpush1.msra.mxu0 %v29
    %1561 = vmatprep.subr.mxu0 %v28
    %1562 = vmatpush1.msra.mxu0 %v27
    %1563 = vmatprep.subr.mxu0 0.0
    %1564 = vmatpush2.msra.mxu0 0.0
    %1565 = vmatprep.subr.mxu0 0.0
    %1566 = vmatpush2.msra.mxu0 0.0
    %1567 = vmatprep.subr.mxu0 0.0
    %1568 = vmatpush2.msra.mxu0 0.0
    %1569 = vmatprep.subr.mxu0 0.0
    %1570 = vmatpush2.msra.mxu0 0.0
    %1571 = vmatprep.subr.mxu0 0.0
    %1572 = vmatpush2.msra.mxu0 0.0
    %1573 = vmatprep.subr.mxu0 0.0
    %1574 = vmatpush2.msra.mxu0 0.0
    %1575 = vmatprep.subr.mxu0 0.0
    %1576 = vmatpush2.msra.mxu0 0.0
    %1577 = vmatprep.subr.mxu0 0.0
    %1578 = vmatpush2.msra.mxu0 0.0
    %1579 = vmatprep.subr.mxu0 0.0
    %1580 = vmatpush2.msra.mxu0 0.0
    %1581 = vmatprep.subr.mxu0 0.0
    %1582 = vmatpush2.msra.mxu0 0.0
    %1583 = vmatprep.subr.mxu0 0.0
    %1584 = vmatpush2.msra.mxu0 0.0
    %1585 = vmatprep.subr.mxu0 0.0
    %1586 = vmatpush2.msra.mxu0 0.0
    %1587 = vmatprep.subr.mxu0 0.0
    %1588 = vmatpush2.msra.mxu0 0.0
    %1589 = vmatprep.subr.mxu0 0.0
    %1590 = vmatpush2.msra.mxu0 0.0
    %1591 = vmatprep.subr.mxu0 0.0
    %1592 = vmatpush2.msra.mxu0 0.0
    %1593 = vmatprep.subr.mxu0 0.0
    %1594 = vmatpush2.msra.mxu0 0.0
    %1595 = vmatprep.mubr.f32.mxu0 0.0
    %1596 = vmatmul.mubr.f32.gmra.mxu0 %v1527
    %v1597 = vpop.f32.mrf.mxu0
    %v1598 = vadd.f32 0.0, %v1597
    %v1599 = vpop.f32.mrf.mxu0
    %v1600 = vadd.f32 0.0, %v1599
    %1601 = vmatprep.mubr.f32.mxu0 0.0
    %1602 = vmatmul.mubr.f32.gmra.mxu0 %v1529
    %v1603 = vpop.f32.mrf.mxu0
    %v1604 = vadd.f32 0.0, %v1603
    %v1605 = vpop.f32.mrf.mxu0
    %v1606 = vadd.f32 0.0, %v1605
    %1607 = vdwg.mxu0
    %v1608 = vadd.f32 %v171, %v1598
    %v1609 = vadd.f32 %v172, %v1604
    %1610 = vmatprep.subr.mxu0 0.0
    %1611 = vmatpush1.msra.mxu0 0.0
    %1612 = vmatprep.subr.mxu0 0.0
    %1613 = vmatpush1.msra.mxu0 0.0
    %1614 = vmatprep.subr.mxu0 0.0
    %1615 = vmatpush1.msra.mxu0 0.0
    %1616 = vmatprep.subr.mxu0 0.0
    %1617 = vmatpush1.msra.mxu0 0.0
    %1618 = vmatprep.subr.mxu0 0.0
    %1619 = vmatpush1.msra.mxu0 0.0
    %1620 = vmatprep.subr.mxu0 0.0
    %1621 = vmatpush1.msra.mxu0 0.0
    %1622 = vmatprep.subr.mxu0 0.0
    %1623 = vmatpush1.msra.mxu0 0.0
    %1624 = vmatprep.subr.mxu0 0.0
    %1625 = vmatpush1.msra.mxu0 0.0
    %1626 = vmatprep.subr.mxu0 0.0
    %1627 = vmatpush1.msra.mxu0 0.0
    %1628 = vmatprep.subr.mxu0 0.0
    %1629 = vmatpush1.msra.mxu0 0.0
    %1630 = vmatprep.subr.mxu0 0.0
    %1631 = vmatpush1.msra.mxu0 0.0
    %1632 = vmatprep.subr.mxu0 0.0
    %1633 = vmatpush1.msra.mxu0 0.0
    %1634 = vmatprep.subr.mxu0 0.0
    %1635 = vmatpush1.msra.mxu0 0.0
    %1636 = vmatprep.subr.mxu0 0.0
    %1637 = vmatpush1.msra.mxu0 0.0
    %1638 = vmatprep.subr.mxu0 0.0
    %1639 = vmatpush1.msra.mxu0 %v1606
    %1640 = vmatprep.subr.mxu0 0.0
    %1641 = vmatpush1.msra.mxu0 %v1600
    %1642 = vmatprep.subr.mxu0 0.0
    %1643 = vmatpush2.msra.mxu0 0.0
    %1644 = vmatprep.subr.mxu0 0.0
    %1645 = vmatpush2.msra.mxu0 0.0
    %1646 = vmatprep.subr.mxu0 0.0
    %1647 = vmatpush2.msra.mxu0 0.0
    %1648 = vmatprep.subr.mxu0 0.0
    %1649 = vmatpush2.msra.mxu0 0.0
    %1650 = vmatprep.subr.mxu0 0.0
    %1651 = vmatpush2.msra.mxu0 0.0
    %1652 = vmatprep.subr.mxu0 0.0
    %1653 = vmatpush2.msra.mxu0 0.0
    %1654 = vmatprep.subr.mxu0 0.0
    %1655 = vmatpush2.msra.mxu0 0.0
    %1656 = vmatprep.subr.mxu0 0.0
    %1657 = vmatpush2.msra.mxu0 0.0
    %1658 = vmatprep.subr.mxu0 0.0
    %1659 = vmatpush2.msra.mxu0 0.0
    %1660 = vmatprep.subr.mxu0 0.0
    %1661 = vmatpush2.msra.mxu0 0.0
    %1662 = vmatprep.subr.mxu0 0.0
    %1663 = vmatpush2.msra.mxu0 0.0
    %1664 = vmatprep.subr.mxu0 0.0
    %1665 = vmatpush2.msra.mxu0 0.0
    %1666 = vmatprep.subr.mxu0 0.0
    %1667 = vmatpush2.msra.mxu0 0.0
    %1668 = vmatprep.subr.mxu0 0.0
    %1669 = vmatpush2.msra.mxu0 0.0
    %1670 = vmatprep.subr.mxu0 0.0
    %1671 = vmatpush2.msra.mxu0 0.0
    %1672 = vmatprep.subr.mxu0 0.0
    %1673 = vmatpush2.msra.mxu0 0.0
    %1674 = vmatprep.mubr.f32.mxu0 0.0
    %1675 = vmatmul.mubr.f32.gmra.mxu0 %v262
    %v1676 = vpop.f32.mrf.mxu0
    %v1677 = vadd.f32 0.0, %v1676
    %v1678 = vpop.f32.mrf.mxu0
    %1679 = vmatprep.mubr.f32.mxu0 0.0
    %1680 = vmatmul.mubr.f32.gmra.mxu0 %v265
    %v1681 = vpop.f32.mrf.mxu0
    %v1682 = vadd.f32 0.0, %v1681
    %v1683 = vpop.f32.mrf.mxu0
    %1684 = vdwg.mxu0
    %v1685 = vadd.f32 %v1608, %v1677
    %v1686 = vadd.f32 %v1609, %v1682
    %1687 = vrot.lane.b32.xlu0 %v1475, 96
    %v1688 = vpop.permute.xlu0 %1687
    %1689 = vrot.lane.b32.xlu0 %v1476, 96
    %v1690 = vpop.permute.xlu0 %1689
    %v1693 = vmul.f32 %v348, %v1688
    %v1694 = vmul.f32 %v348, %v1690
    %v1695 = vadd.f32 %v1685, %v1693
    %v1696 = vadd.f32 %v1686, %v1694
    %v1697 = vxor.u32 %v1695, 2147483648
    %v1698 = vxor.u32 %v1696, 2147483648
    %v1699 = vmul.f32 %v1697, 1.442695
    %v1700 = vpow.pop %v1699
    %v1701 = vmul.f32 %v1698, 1.442695
    %v1702 = vpow.pop %v1701
    %v1703 = vadd.f32 %v1700, 1.0
    %v1704 = vadd.f32 %v1702, 1.0
    %v1705 = vrcp.pop %v1703
    %v1706 = vmul.f32 1.0, %v1705
    %v1707 = vrcp.pop %v1704
    %v1708 = vmul.f32 1.0, %v1707
    %v1709 = vmul.f32 %v348, %v1475
    %v1710 = vmul.f32 %v348, %v1476
    %v1711 = vadd.f32 %v1685, %v1709
    %v1712 = vadd.f32 %v1686, %v1710
    %v1713 = vxor.u32 %v1711, 2147483648
    %v1714 = vxor.u32 %v1712, 2147483648
    %v1715 = vmul.f32 %v1713, 1.442695
    %v1716 = vpow.pop %v1715
    %v1717 = vmul.f32 %v1714, 1.442695
    %v1718 = vpow.pop %v1717
    %v1719 = vadd.f32 %v1716, 1.0
    %v1720 = vadd.f32 %v1718, 1.0
    %v1721 = vrcp.pop %v1719
    %v1722 = vmul.f32 1.0, %v1721
    %v1723 = vrcp.pop %v1720
    %v1724 = vmul.f32 1.0, %v1723
    %v1725 = vtanh.pop %v1685
    %v1726 = vtanh.pop %v1686
    %v1727 = vmul.f32 %v1722, %v1475
    %v1728 = vmul.f32 %v1724, %v1476
    %1731 = vrot.lane.b32.xlu0 %v1725, 64
    %v1732 = vpop.permute.xlu0 %1731
    %1733 = vrot.lane.b32.xlu0 %v1726, 64
    %v1734 = vpop.permute.xlu0 %1733
    %v1737 = vmul.f32 %v1706, %v1732
    %v1738 = vmul.f32 %v1708, %v1734
    %1741 = vrot.lane.b32.xlu0 %v1737, 32
    %v1742 = vpop.permute.xlu0 %1741
    %1743 = vrot.lane.b32.xlu0 %v1738, 32
    %v1744 = vpop.permute.xlu0 %1743
    %v1747 = vadd.f32 %v1727, %v1742
    %v1748 = vadd.f32 %v1728, %v1744
    %1751 = vrot.lane.b32.xlu0 %v1747, 32
    %v1752 = vpop.permute.xlu0 %1751
    %1753 = vrot.lane.b32.xlu0 %v1748, 32
    %v1754 = vpop.permute.xlu0 %1753
    %v1757 = vmul.f32 %v348, %v1752
    %v1758 = vmul.f32 %v348, %v1754
    %1761 = vrot.lane.b32.xlu0 %v1757, 32
    %v1762 = vpop.permute.xlu0 %1761
    %1763 = vrot.lane.b32.xlu0 %v1758, 32
    %v1764 = vpop.permute.xlu0 %1763
    %v1767 = vadd.f32 %v1685, %v1762
    %v1768 = vadd.f32 %v1686, %v1764
    %v1769 = vxor.u32 %v1767, 2147483648
    %v1770 = vxor.u32 %v1768, 2147483648
    %v1771 = vmul.f32 %v1769, 1.442695
    %v1772 = vpow.pop %v1771
    %v1773 = vmul.f32 %v1770, 1.442695
    %v1774 = vpow.pop %v1773
    %v1775 = vadd.f32 %v1772, 1.0
    %v1776 = vadd.f32 %v1774, 1.0
    %v1777 = vrcp.pop %v1775
    %v1778 = vmul.f32 1.0, %v1777
    %v1779 = vrcp.pop %v1776
    %v1780 = vmul.f32 1.0, %v1779
    %v1781 = vtanh.pop %v1747
    %v1782 = vtanh.pop %v1748
    %1785 = vrot.lane.b32.xlu0 %v1781, 64
    %v1786 = vpop.permute.xlu0 %1785
    %1787 = vrot.lane.b32.xlu0 %v1782, 64
    %v1788 = vpop.permute.xlu0 %1787
    %v1791 = vmul.f32 %v1778, %v1786
    %v1792 = vmul.f32 %v1780, %v1788
    %1795 = vrot.lane.b32.xlu0 %v1791, 32
    %v1796 = vpop.permute.xlu0 %1795
    %1797 = vrot.lane.b32.xlu0 %v1792, 32
    %v1798 = vpop.permute.xlu0 %1797
    %v1799 = vsel %vm177, %v1796, 0
    %v1801 = vsel %vm177, %v1798, 0
    %1803 = vmatprep.subr.mxu0 0.0
    %1804 = vmatpush1.msra.mxu0 0.0
    %1805 = vmatprep.subr.mxu0 0.0
    %1806 = vmatpush1.msra.mxu0 0.0
    %1807 = vmatprep.subr.mxu0 0.0
    %1808 = vmatpush1.msra.mxu0 0.0
    %1809 = vmatprep.subr.mxu0 0.0
    %1810 = vmatpush1.msra.mxu0 0.0
    %1811 = vmatprep.subr.mxu0 0.0
    %1812 = vmatpush1.msra.mxu0 0.0
    %1813 = vmatprep.subr.mxu0 0.0
    %1814 = vmatpush1.msra.mxu0 0.0
    %1815 = vmatprep.subr.mxu0 0.0
    %1816 = vmatpush1.msra.mxu0 0.0
    %1817 = vmatprep.subr.mxu0 0.0
    %1818 = vmatpush1.msra.mxu0 0.0
    %1819 = vmatprep.subr.mxu0 0.0
    %1820 = vmatpush1.msra.mxu0 0.0
    %1821 = vmatprep.subr.mxu0 0.0
    %1822 = vmatpush1.msra.mxu0 0.0
    %1823 = vmatprep.subr.mxu0 0.0
    %1824 = vmatpush1.msra.mxu0 0.0
    %1825 = vmatprep.subr.mxu0 0.0
    %1826 = vmatpush1.msra.mxu0 0.0
    %1827 = vmatprep.subr.mxu0 %v34
    %1828 = vmatpush1.msra.mxu0 %v33
    %1829 = vmatprep.subr.mxu0 %v32
    %1830 = vmatpush1.msra.mxu0 %v31
    %1831 = vmatprep.subr.mxu0 %v30
    %1832 = vmatpush1.msra.mxu0 %v29
    %1833 = vmatprep.subr.mxu0 %v28
    %1834 = vmatpush1.msra.mxu0 %v27
    %1835 = vmatprep.subr.mxu0 0.0
    %1836 = vmatpush2.msra.mxu0 0.0
    %1837 = vmatprep.subr.mxu0 0.0
    %1838 = vmatpush2.msra.mxu0 0.0
    %1839 = vmatprep.subr.mxu0 0.0
    %1840 = vmatpush2.msra.mxu0 0.0
    %1841 = vmatprep.subr.mxu0 0.0
    %1842 = vmatpush2.msra.mxu0 0.0
    %1843 = vmatprep.subr.mxu0 0.0
    %1844 = vmatpush2.msra.mxu0 0.0
    %1845 = vmatprep.subr.mxu0 0.0
    %1846 = vmatpush2.msra.mxu0 0.0
    %1847 = vmatprep.subr.mxu0 0.0
    %1848 = vmatpush2.msra.mxu0 0.0
    %1849 = vmatprep.subr.mxu0 0.0
    %1850 = vmatpush2.msra.mxu0 0.0
    %1851 = vmatprep.subr.mxu0 0.0
    %1852 = vmatpush2.msra.mxu0 0.0
    %1853 = vmatprep.subr.mxu0 0.0
    %1854 = vmatpush2.msra.mxu0 0.0
    %1855 = vmatprep.subr.mxu0 0.0
    %1856 = vmatpush2.msra.mxu0 0.0
    %1857 = vmatprep.subr.mxu0 0.0
    %1858 = vmatpush2.msra.mxu0 0.0
    %1859 = vmatprep.subr.mxu0 0.0
    %1860 = vmatpush2.msra.mxu0 0.0
    %1861 = vmatprep.subr.mxu0 0.0
    %1862 = vmatpush2.msra.mxu0 0.0
    %1863 = vmatprep.subr.mxu0 0.0
    %1864 = vmatpush2.msra.mxu0 0.0
    %1865 = vmatprep.subr.mxu0 0.0
    %1866 = vmatpush2.msra.mxu0 0.0
    %1867 = vmatprep.mubr.f32.mxu0 0.0
    %1868 = vmatmul.mubr.f32.gmra.mxu0 %v1799
    %v1869 = vpop.f32.mrf.mxu0
    %v1870 = vadd.f32 0.0, %v1869
    %v1871 = vpop.f32.mrf.mxu0
    %v1872 = vadd.f32 0.0, %v1871
    %1873 = vmatprep.mubr.f32.mxu0 0.0
    %1874 = vmatmul.mubr.f32.gmra.mxu0 %v1801
    %v1875 = vpop.f32.mrf.mxu0
    %v1876 = vadd.f32 0.0, %v1875
    %v1877 = vpop.f32.mrf.mxu0
    %v1878 = vadd.f32 0.0, %v1877
    %1879 = vdwg.mxu0
    %v1880 = vadd.f32 %v173, %v1870
    %v1881 = vadd.f32 %v174, %v1876
    %1882 = vmatprep.subr.mxu0 0.0
    %1883 = vmatpush1.msra.mxu0 0.0
    %1884 = vmatprep.subr.mxu0 0.0
    %1885 = vmatpush1.msra.mxu0 0.0
    %1886 = vmatprep.subr.mxu0 0.0
    %1887 = vmatpush1.msra.mxu0 0.0
    %1888 = vmatprep.subr.mxu0 0.0
    %1889 = vmatpush1.msra.mxu0 0.0
    %1890 = vmatprep.subr.mxu0 0.0
    %1891 = vmatpush1.msra.mxu0 0.0
    %1892 = vmatprep.subr.mxu0 0.0
    %1893 = vmatpush1.msra.mxu0 0.0
    %1894 = vmatprep.subr.mxu0 0.0
    %1895 = vmatpush1.msra.mxu0 0.0
    %1896 = vmatprep.subr.mxu0 0.0
    %1897 = vmatpush1.msra.mxu0 0.0
    %1898 = vmatprep.subr.mxu0 0.0
    %1899 = vmatpush1.msra.mxu0 0.0
    %1900 = vmatprep.subr.mxu0 0.0
    %1901 = vmatpush1.msra.mxu0 0.0
    %1902 = vmatprep.subr.mxu0 0.0
    %1903 = vmatpush1.msra.mxu0 0.0
    %1904 = vmatprep.subr.mxu0 0.0
    %1905 = vmatpush1.msra.mxu0 0.0
    %1906 = vmatprep.subr.mxu0 0.0
    %1907 = vmatpush1.msra.mxu0 0.0
    %1908 = vmatprep.subr.mxu0 0.0
    %1909 = vmatpush1.msra.mxu0 0.0
    %1910 = vmatprep.subr.mxu0 0.0
    %1911 = vmatpush1.msra.mxu0 %v1878
    %1912 = vmatprep.subr.mxu0 0.0
    %1913 = vmatpush1.msra.mxu0 %v1872
    %1914 = vmatprep.subr.mxu0 0.0
    %1915 = vmatpush2.msra.mxu0 0.0
    %1916 = vmatprep.subr.mxu0 0.0
    %1917 = vmatpush2.msra.mxu0 0.0
    %1918 = vmatprep.subr.mxu0 0.0
    %1919 = vmatpush2.msra.mxu0 0.0
    %1920 = vmatprep.subr.mxu0 0.0
    %1921 = vmatpush2.msra.mxu0 0.0
    %1922 = vmatprep.subr.mxu0 0.0
    %1923 = vmatpush2.msra.mxu0 0.0
    %1924 = vmatprep.subr.mxu0 0.0
    %1925 = vmatpush2.msra.mxu0 0.0
    %1926 = vmatprep.subr.mxu0 0.0
    %1927 = vmatpush2.msra.mxu0 0.0
    %1928 = vmatprep.subr.mxu0 0.0
    %1929 = vmatpush2.msra.mxu0 0.0
    %1930 = vmatprep.subr.mxu0 0.0
    %1931 = vmatpush2.msra.mxu0 0.0
    %1932 = vmatprep.subr.mxu0 0.0
    %1933 = vmatpush2.msra.mxu0 0.0
    %1934 = vmatprep.subr.mxu0 0.0
    %1935 = vmatpush2.msra.mxu0 0.0
    %1936 = vmatprep.subr.mxu0 0.0
    %1937 = vmatpush2.msra.mxu0 0.0
    %1938 = vmatprep.subr.mxu0 0.0
    %1939 = vmatpush2.msra.mxu0 0.0
    %1940 = vmatprep.subr.mxu0 0.0
    %1941 = vmatpush2.msra.mxu0 0.0
    %1942 = vmatprep.subr.mxu0 0.0
    %1943 = vmatpush2.msra.mxu0 0.0
    %1944 = vmatprep.subr.mxu0 0.0
    %1945 = vmatpush2.msra.mxu0 0.0
    %1946 = vmatprep.mubr.f32.mxu0 0.0
    %1947 = vmatmul.mubr.f32.gmra.mxu0 %v262
    %v1948 = vpop.f32.mrf.mxu0
    %v1949 = vadd.f32 0.0, %v1948
    %v1950 = vpop.f32.mrf.mxu0
    %1951 = vmatprep.mubr.f32.mxu0 0.0
    %1952 = vmatmul.mubr.f32.gmra.mxu0 %v265
    %v1953 = vpop.f32.mrf.mxu0
    %v1954 = vadd.f32 0.0, %v1953
    %v1955 = vpop.f32.mrf.mxu0
    %1956 = vdwg.mxu0
    %v1957 = vadd.f32 %v1880, %v1949
    %v1958 = vadd.f32 %v1881, %v1954
    %1959 = vrot.lane.b32.xlu0 %v1747, 96
    %v1960 = vpop.permute.xlu0 %1959
    %1961 = vrot.lane.b32.xlu0 %v1748, 96
    %v1962 = vpop.permute.xlu0 %1961
    %v1965 = vmul.f32 %v348, %v1960
    %v1966 = vmul.f32 %v348, %v1962
    %v1967 = vadd.f32 %v1957, %v1965
    %v1968 = vadd.f32 %v1958, %v1966
    %v1969 = vxor.u32 %v1967, 2147483648
    %v1970 = vxor.u32 %v1968, 2147483648
    %v1971 = vmul.f32 %v1969, 1.442695
    %v1972 = vpow.pop %v1971
    %v1973 = vmul.f32 %v1970, 1.442695
    %v1974 = vpow.pop %v1973
    %v1975 = vadd.f32 %v1972, 1.0
    %v1976 = vadd.f32 %v1974, 1.0
    %v1977 = vrcp.pop %v1975
    %v1978 = vmul.f32 1.0, %v1977
    %v1979 = vrcp.pop %v1976
    %v1980 = vmul.f32 1.0, %v1979
    %v1981 = vmul.f32 %v348, %v1747
    %v1982 = vmul.f32 %v348, %v1748
    %v1983 = vadd.f32 %v1957, %v1981
    %v1984 = vadd.f32 %v1958, %v1982
    %v1985 = vxor.u32 %v1983, 2147483648
    %v1986 = vxor.u32 %v1984, 2147483648
    %v1987 = vmul.f32 %v1985, 1.442695
    %v1988 = vpow.pop %v1987
    %v1989 = vmul.f32 %v1986, 1.442695
    %v1990 = vpow.pop %v1989
    %v1991 = vadd.f32 %v1988, 1.0
    %v1992 = vadd.f32 %v1990, 1.0
    %v1993 = vrcp.pop %v1991
    %v1994 = vmul.f32 1.0, %v1993
    %v1995 = vrcp.pop %v1992
    %v1996 = vmul.f32 1.0, %v1995
    %v1997 = vtanh.pop %v1957
    %v1998 = vtanh.pop %v1958
    %v1999 = vmul.f32 %v1994, %v1747
    %v2000 = vmul.f32 %v1996, %v1748
    %2003 = vrot.lane.b32.xlu0 %v1997, 64
    %v2004 = vpop.permute.xlu0 %2003
    %2005 = vrot.lane.b32.xlu0 %v1998, 64
    %v2006 = vpop.permute.xlu0 %2005
    %v2009 = vmul.f32 %v1978, %v2004
    %v2010 = vmul.f32 %v1980, %v2006
    %2013 = vrot.lane.b32.xlu0 %v2009, 32
    %v2014 = vpop.permute.xlu0 %2013
    %2015 = vrot.lane.b32.xlu0 %v2010, 32
    %v2016 = vpop.permute.xlu0 %2015
    %v2019 = vadd.f32 %v1999, %v2014
    %v2020 = vadd.f32 %v2000, %v2016
    %2023 = vrot.lane.b32.xlu0 %v2019, 32
    %v2024 = vpop.permute.xlu0 %2023
    %2025 = vrot.lane.b32.xlu0 %v2020, 32
    %v2026 = vpop.permute.xlu0 %2025
    %v2029 = vmul.f32 %v348, %v2024
    %v2030 = vmul.f32 %v348, %v2026
    %2033 = vrot.lane.b32.xlu0 %v2029, 32
    %v2034 = vpop.permute.xlu0 %2033
    %2035 = vrot.lane.b32.xlu0 %v2030, 32
    %v2036 = vpop.permute.xlu0 %2035
    %v2039 = vadd.f32 %v1957, %v2034
    %v2040 = vadd.f32 %v1958, %v2036
    %v2041 = vxor.u32 %v2039, 2147483648
    %v2042 = vxor.u32 %v2040, 2147483648
    %v2043 = vmul.f32 %v2041, 1.442695
    %v2044 = vpow.pop %v2043
    %v2045 = vmul.f32 %v2042, 1.442695
    %v2046 = vpow.pop %v2045
    %v2047 = vadd.f32 %v2044, 1.0
    %v2048 = vadd.f32 %v2046, 1.0
    %v2049 = vrcp.pop %v2047
    %v2050 = vmul.f32 1.0, %v2049
    %v2051 = vrcp.pop %v2048
    %v2052 = vmul.f32 1.0, %v2051
    %v2053 = vtanh.pop %v2019
    %v2054 = vtanh.pop %v2020
    %2057 = vrot.lane.b32.xlu0 %v2053, 64
    %v2058 = vpop.permute.xlu0 %2057
    %2059 = vrot.lane.b32.xlu0 %v2054, 64
    %v2060 = vpop.permute.xlu0 %2059
    %v2063 = vmul.f32 %v2050, %v2058
    %v2064 = vmul.f32 %v2052, %v2060
    %2067 = vrot.lane.b32.xlu0 %v2063, 32
    %v2068 = vpop.permute.xlu0 %2067
    %2069 = vrot.lane.b32.xlu0 %v2064, 32
    %v2070 = vpop.permute.xlu0 %2069
    %v2071 = vsel %vm177, %v2068, 0
    %v2073 = vsel %vm177, %v2070, 0
    %2075 = vmatprep.subr.mxu0 0.0
    %2076 = vmatpush1.msra.mxu0 0.0
    %2077 = vmatprep.subr.mxu0 0.0
    %2078 = vmatpush1.msra.mxu0 0.0
    %2079 = vmatprep.subr.mxu0 0.0
    %2080 = vmatpush1.msra.mxu0 0.0
    %2081 = vmatprep.subr.mxu0 0.0
    %2082 = vmatpush1.msra.mxu0 0.0
    %2083 = vmatprep.subr.mxu0 0.0
    %2084 = vmatpush1.msra.mxu0 0.0
    %2085 = vmatprep.subr.mxu0 0.0
    %2086 = vmatpush1.msra.mxu0 0.0
    %2087 = vmatprep.subr.mxu0 0.0
    %2088 = vmatpush1.msra.mxu0 0.0
    %2089 = vmatprep.subr.mxu0 0.0
    %2090 = vmatpush1.msra.mxu0 0.0
    %2091 = vmatprep.subr.mxu0 0.0
    %2092 = vmatpush1.msra.mxu0 0.0
    %2093 = vmatprep.subr.mxu0 0.0
    %2094 = vmatpush1.msra.mxu0 0.0
    %2095 = vmatprep.subr.mxu0 0.0
    %2096 = vmatpush1.msra.mxu0 0.0
    %2097 = vmatprep.subr.mxu0 0.0
    %2098 = vmatpush1.msra.mxu0 0.0
    %2099 = vmatprep.subr.mxu0 %v34
    %2100 = vmatpush1.msra.mxu0 %v33
    %2101 = vmatprep.subr.mxu0 %v32
    %2102 = vmatpush1.msra.mxu0 %v31
    %2103 = vmatprep.subr.mxu0 %v30
    %2104 = vmatpush1.msra.mxu0 %v29
    %2105 = vmatprep.subr.mxu0 %v28
    %2106 = vmatpush1.msra.mxu0 %v27
    %2107 = vmatprep.subr.mxu0 0.0
    %2108 = vmatpush2.msra.mxu0 0.0
    %2109 = vmatprep.subr.mxu0 0.0
    %2110 = vmatpush2.msra.mxu0 0.0
    %2111 = vmatprep.subr.mxu0 0.0
    %2112 = vmatpush2.msra.mxu0 0.0
    %2113 = vmatprep.subr.mxu0 0.0
    %2114 = vmatpush2.msra.mxu0 0.0
    %2115 = vmatprep.subr.mxu0 0.0
    %2116 = vmatpush2.msra.mxu0 0.0
    %2117 = vmatprep.subr.mxu0 0.0
    %2118 = vmatpush2.msra.mxu0 0.0
    %2119 = vmatprep.subr.mxu0 0.0
    %2120 = vmatpush2.msra.mxu0 0.0
    %2121 = vmatprep.subr.mxu0 0.0
    %2122 = vmatpush2.msra.mxu0 0.0
    %2123 = vmatprep.subr.mxu0 0.0
    %2124 = vmatpush2.msra.mxu0 0.0
    %2125 = vmatprep.subr.mxu0 0.0
    %2126 = vmatpush2.msra.mxu0 0.0
    %2127 = vmatprep.subr.mxu0 0.0
    %2128 = vmatpush2.msra.mxu0 0.0
    %2129 = vmatprep.subr.mxu0 0.0
    %2130 = vmatpush2.msra.mxu0 0.0
    %2131 = vmatprep.subr.mxu0 0.0
    %2132 = vmatpush2.msra.mxu0 0.0
    %2133 = vmatprep.subr.mxu0 0.0
    %2134 = vmatpush2.msra.mxu0 0.0
    %2135 = vmatprep.subr.mxu0 0.0
    %2136 = vmatpush2.msra.mxu0 0.0
    %2137 = vmatprep.subr.mxu0 0.0
    %2138 = vmatpush2.msra.mxu0 0.0
    %2139 = vmatprep.mubr.f32.mxu0 0.0
    %2140 = vmatmul.mubr.f32.gmra.mxu0 %v2071
    %v2141 = vpop.f32.mrf.mxu0
    %v2142 = vadd.f32 0.0, %v2141
    %v2143 = vpop.f32.mrf.mxu0
    %v2144 = vadd.f32 0.0, %v2143
    %2145 = vmatprep.mubr.f32.mxu0 0.0
    %2146 = vmatmul.mubr.f32.gmra.mxu0 %v2073
    %v2147 = vpop.f32.mrf.mxu0
    %v2148 = vadd.f32 0.0, %v2147
    %v2149 = vpop.f32.mrf.mxu0
    %v2150 = vadd.f32 0.0, %v2149
    %2151 = vdwg.mxu0
    %v2152 = vadd.f32 %v175, %v2142
    %v2153 = vadd.f32 %v176, %v2148
    %2154 = vmatprep.subr.mxu0 0.0
    %2155 = vmatpush1.msra.mxu0 0.0
    %2156 = vmatprep.subr.mxu0 0.0
    %2157 = vmatpush1.msra.mxu0 0.0
    %2158 = vmatprep.subr.mxu0 0.0
    %2159 = vmatpush1.msra.mxu0 0.0
    %2160 = vmatprep.subr.mxu0 0.0
    %2161 = vmatpush1.msra.mxu0 0.0
    %2162 = vmatprep.subr.mxu0 0.0
    %2163 = vmatpush1.msra.mxu0 0.0
    %2164 = vmatprep.subr.mxu0 0.0
    %2165 = vmatpush1.msra.mxu0 0.0
    %2166 = vmatprep.subr.mxu0 0.0
    %2167 = vmatpush1.msra.mxu0 0.0
    %2168 = vmatprep.subr.mxu0 0.0
    %2169 = vmatpush1.msra.mxu0 0.0
    %2170 = vmatprep.subr.mxu0 0.0
    %2171 = vmatpush1.msra.mxu0 0.0
    %2172 = vmatprep.subr.mxu0 0.0
    %2173 = vmatpush1.msra.mxu0 0.0
    %2174 = vmatprep.subr.mxu0 0.0
    %2175 = vmatpush1.msra.mxu0 0.0
    %2176 = vmatprep.subr.mxu0 0.0
    %2177 = vmatpush1.msra.mxu0 0.0
    %2178 = vmatprep.subr.mxu0 0.0
    %2179 = vmatpush1.msra.mxu0 0.0
    %2180 = vmatprep.subr.mxu0 0.0
    %2181 = vmatpush1.msra.mxu0 0.0
    %2182 = vmatprep.subr.mxu0 0.0
    %2183 = vmatpush1.msra.mxu0 %v2150
    %2184 = vmatprep.subr.mxu0 0.0
    %2185 = vmatpush1.msra.mxu0 %v2144
    %2186 = vmatprep.subr.mxu0 0.0
    %2187 = vmatpush2.msra.mxu0 0.0
    %2188 = vmatprep.subr.mxu0 0.0
    %2189 = vmatpush2.msra.mxu0 0.0
    %2190 = vmatprep.subr.mxu0 0.0
    %2191 = vmatpush2.msra.mxu0 0.0
    %2192 = vmatprep.subr.mxu0 0.0
    %2193 = vmatpush2.msra.mxu0 0.0
    %2194 = vmatprep.subr.mxu0 0.0
    %2195 = vmatpush2.msra.mxu0 0.0
    %2196 = vmatprep.subr.mxu0 0.0
    %2197 = vmatpush2.msra.mxu0 0.0
    %2198 = vmatprep.subr.mxu0 0.0
    %2199 = vmatpush2.msra.mxu0 0.0
    %2200 = vmatprep.subr.mxu0 0.0
    %2201 = vmatpush2.msra.mxu0 0.0
    %2202 = vmatprep.subr.mxu0 0.0
    %2203 = vmatpush2.msra.mxu0 0.0
    %2204 = vmatprep.subr.mxu0 0.0
    %2205 = vmatpush2.msra.mxu0 0.0
    %2206 = vmatprep.subr.mxu0 0.0
    %2207 = vmatpush2.msra.mxu0 0.0
    %2208 = vmatprep.subr.mxu0 0.0
    %2209 = vmatpush2.msra.mxu0 0.0
    %2210 = vmatprep.subr.mxu0 0.0
    %2211 = vmatpush2.msra.mxu0 0.0
    %2212 = vmatprep.subr.mxu0 0.0
    %2213 = vmatpush2.msra.mxu0 0.0
    %2214 = vmatprep.subr.mxu0 0.0
    %2215 = vmatpush2.msra.mxu0 0.0
    %2216 = vmatprep.subr.mxu0 0.0
    %2217 = vmatpush2.msra.mxu0 0.0
    %2218 = vmatprep.mubr.f32.mxu0 0.0
    %2219 = vmatmul.mubr.f32.gmra.mxu0 %v262
    %v2220 = vpop.f32.mrf.mxu0
    %v2221 = vadd.f32 0.0, %v2220
    %v2222 = vpop.f32.mrf.mxu0
    %2223 = vmatprep.mubr.f32.mxu0 0.0
    %2224 = vmatmul.mubr.f32.gmra.mxu0 %v265
    %v2225 = vpop.f32.mrf.mxu0
    %v2226 = vadd.f32 0.0, %v2225
    %v2227 = vpop.f32.mrf.mxu0
    %2228 = vdwg.mxu0
    %v2229 = vadd.f32 %v2152, %v2221
    %v2230 = vadd.f32 %v2153, %v2226
    %2231 = vrot.lane.b32.xlu0 %v2019, 96
    %v2232 = vpop.permute.xlu0 %2231
    %2233 = vrot.lane.b32.xlu0 %v2020, 96
    %v2234 = vpop.permute.xlu0 %2233
    %v2237 = vmul.f32 %v348, %v2232
    %v2238 = vmul.f32 %v348, %v2234
    %v2239 = vadd.f32 %v2229, %v2237
    %v2240 = vadd.f32 %v2230, %v2238
    %v2241 = vxor.u32 %v2239, 2147483648
    %v2242 = vxor.u32 %v2240, 2147483648
    %v2243 = vmul.f32 %v2241, 1.442695
    %v2244 = vpow.pop %v2243
    %v2245 = vmul.f32 %v2242, 1.442695
    %v2246 = vpow.pop %v2245
    %v2247 = vadd.f32 %v2244, 1.0
    %v2248 = vadd.f32 %v2246, 1.0
    %v2249 = vrcp.pop %v2247
    %v2250 = vmul.f32 1.0, %v2249
    %v2251 = vrcp.pop %v2248
    %v2252 = vmul.f32 1.0, %v2251
    %v2253 = vmul.f32 %v348, %v2019
    %v2254 = vmul.f32 %v348, %v2020
    %v2255 = vadd.f32 %v2229, %v2253
    %v2256 = vadd.f32 %v2230, %v2254
    %v2257 = vxor.u32 %v2255, 2147483648
    %v2258 = vxor.u32 %v2256, 2147483648
    %v2259 = vmul.f32 %v2257, 1.442695
    %v2260 = vpow.pop %v2259
    %v2261 = vmul.f32 %v2258, 1.442695
    %v2262 = vpow.pop %v2261
    %v2263 = vadd.f32 %v2260, 1.0
    %v2264 = vadd.f32 %v2262, 1.0
    %v2265 = vrcp.pop %v2263
    %v2266 = vmul.f32 1.0, %v2265
    %v2267 = vrcp.pop %v2264
    %v2268 = vmul.f32 1.0, %v2267
    %v2269 = vtanh.pop %v2229
    %v2270 = vtanh.pop %v2230
    %v2271 = vmul.f32 %v2266, %v2019
    %v2272 = vmul.f32 %v2268, %v2020
    %2275 = vrot.lane.b32.xlu0 %v2269, 64
    %v2276 = vpop.permute.xlu0 %2275
    %2277 = vrot.lane.b32.xlu0 %v2270, 64
    %v2278 = vpop.permute.xlu0 %2277
    %v2281 = vmul.f32 %v2250, %v2276
    %v2282 = vmul.f32 %v2252, %v2278
    %2285 = vrot.lane.b32.xlu0 %v2281, 32
    %v2286 = vpop.permute.xlu0 %2285
    %2287 = vrot.lane.b32.xlu0 %v2282, 32
    %v2288 = vpop.permute.xlu0 %2287
    %v2291 = vadd.f32 %v2271, %v2286
    %v2292 = vadd.f32 %v2272, %v2288
    %2295 = vrot.lane.b32.xlu0 %v2291, 32
    %v2296 = vpop.permute.xlu0 %2295
    %2297 = vrot.lane.b32.xlu0 %v2292, 32
    %v2298 = vpop.permute.xlu0 %2297
    %v2301 = vmul.f32 %v348, %v2296
    %v2302 = vmul.f32 %v348, %v2298
    %2305 = vrot.lane.b32.xlu0 %v2301, 32
    %v2306 = vpop.permute.xlu0 %2305
    %2307 = vrot.lane.b32.xlu0 %v2302, 32
    %v2308 = vpop.permute.xlu0 %2307
    %v2311 = vadd.f32 %v2229, %v2306
    %v2312 = vadd.f32 %v2230, %v2308
    %v2313 = vxor.u32 %v2311, 2147483648
    %v2314 = vxor.u32 %v2312, 2147483648
    %v2315 = vmul.f32 %v2313, 1.442695
    %v2316 = vpow.pop %v2315
    %v2317 = vmul.f32 %v2314, 1.442695
    %v2318 = vpow.pop %v2317
    %v2319 = vadd.f32 %v2316, 1.0
    %v2320 = vadd.f32 %v2318, 1.0
    %v2321 = vrcp.pop %v2319
    %v2322 = vmul.f32 1.0, %v2321
    %v2323 = vrcp.pop %v2320
    %v2324 = vmul.f32 1.0, %v2323
    %v2325 = vtanh.pop %v2291
    %v2326 = vtanh.pop %v2292
    %2329 = vrot.lane.b32.xlu0 %v2325, 64
    %v2330 = vpop.permute.xlu0 %2329
    %2331 = vrot.lane.b32.xlu0 %v2326, 64
    %v2332 = vpop.permute.xlu0 %2331
    %v2335 = vmul.f32 %v2322, %v2330
    %v2336 = vmul.f32 %v2324, %v2332
    %2339 = vrot.lane.b32.xlu0 %v2335, 32
    %v2340 = vpop.permute.xlu0 %2339
    %2341 = vrot.lane.b32.xlu0 %v2336, 32
    %v2342 = vpop.permute.xlu0 %2341
    %2345 = vst.msk [vmem:[#allocation2] sm:$0xff] %vm177, %v2340
    %2346 = vst.msk [vmem:[#allocation2 + $0x8] sm:$0xff] %vm177, %v2342
    // Predicated region
    $region26: #{tpu_custom_call.1} parent=1 // pred_check
      _
    $region27: #{tpu_custom_call.1} parent=1 // pred_check_branch
      %2348 = sbr.rel (0) target = $region29
    $region28: #{tpu_custom_call.1} parent=1 // pred_region
      %s2350 = ssub.s32 256, 256
      %2351 = vsyncadd [#allocation3], %s2350
      %s2352 = sshll.u32 [#allocation2], 4
      %s2353 = int_to_ptr.vmem [resolvable:$true] %s2352
      %2358 = dma.vmem_to_hbm [thread:$0]  %s2353, 256, %s6, [#allocation3], 128, 128, 8
    $region29: #{tpu_custom_call.1} parent=1 // pred_fallthru
      _
    // Predicated region
    $region30: #{tpu_custom_call.1} parent=1 // pred_check
      _
    $region31: #{tpu_custom_call.1} parent=1 // pred_check_branch
      %2360 = sbr.rel (0) target = $region33
    $region32: #{tpu_custom_call.1} parent=1 // pred_region
      %2361 = dma.done [#allocation3], 256
    $region33: #{tpu_custom_call.1} parent=1 // pred_fallthru
      _
    %2362 = vsyncpa [#allocation3], 1

</llo_original>
